<compile_context>
chip_gen: v6e
topology: v6e:2x2x1
jax: 0.10.0
libtpu: 0.0.40
codegen_flags: <defaults>
</compile_context>

<pallas_src>
import functools

import jax
import jax.numpy as jnp
from jax import lax
from jax.experimental import pallas as pl
from jax.experimental.pallas import tpu as pltpu


_ACC_BUDGET_BYTES = 128 * 1024        # keep the f32 accumulator ~vreg sized
_IN_BLOCK_BUDGET_BYTES = 4 * 1024 * 1024   # per input buffer (x2 for double buffer)


def _round_up(x, m):
    return ((x + m - 1) // m) * m


def _dws_kernel(x_ref, wdw_ref, bdw_ref, wpw_ref, bpw_ref, o_ref, *, K, s2):
    """Fused depthwise(KxK) + pointwise(1x1) conv for one (batch, row-tile) block.

    x_ref   : (RH, RW, Cp)    halo'd, zero-padded NHWC input window (channels padded)
    wdw_ref : (K*K, Cp)       depthwise weights, tap-major, channel padded
    bdw_ref : (1, Cp)         depthwise bias
    wpw_ref : (Cp, Cpo)       pointwise weights (channel padded both dims)
    bpw_ref : (1, Cpo)        pointwise bias
    o_ref   : (TH, Wo_p, Cpo) output tile (lane-dense Cpo, sublane-aligned Wo_p)

    Both strides are fused: output (i, j) reads input rows/cols i*s2 + kh / j*s2 + kw.
    """
    TH, Wo, Cpo = o_ref.shape
    Cp = x_ref.shape[-1]

    # ---- depthwise conv (VPU shifted-window MAC), stride fused to s2 = s*s ----
    acc = jnp.zeros((TH, Wo, Cp), jnp.float32)
    for kh in range(K):
        for kw in range(K):
            if s2 == 1:
                patch = x_ref[kh:kh + TH, kw:kw + Wo, :]
            else:
                patch = x_ref[pl.ds(kh, TH, stride=s2),
                              pl.ds(kw, Wo, stride=s2), :]
            w = wdw_ref[kh * K + kw, :].astype(jnp.float32)
            acc = acc + patch.astype(jnp.float32) * w[None, None, :]
    acc = acc + bdw_ref[0, :].astype(jnp.float32)[None, None, :]

    # ---- pointwise 1x1 conv on the MXU (Cp-wide contraction, lane-dense Cpo) ----
    flat = acc.reshape(TH * Wo, Cp)                    # Wo is a multiple of 8 -> free
    y = jnp.dot(flat, wpw_ref[...].astype(jnp.float32),
                preferred_element_type=jnp.float32)
    y = y + bpw_ref[0, :].astype(jnp.float32)[None, :]
    o_ref[...] = y.reshape(TH, Wo, Cpo).astype(o_ref.dtype)


def dws_convolution(x_nchw, dw_w, dw_b, pw_w, pw_b, *, kernel_size, stride, padding):
    """x_nchw: (N, Cin, H, W); dw_w: (Cin, 1, K, K); pw_w: (Cout, Cin, 1, 1)."""
    N, Cin, H, W = x_nchw.shape
    Cout = pw_w.shape[0]
    K, s, p = kernel_size, stride, padding
    s2 = s * s

    # conv output sizes (PyTorch semantics)
    Hd = (H + 2 * p - K) // s + 1
    Wd = (W + 2 * p - K) // s + 1
    Ho = (Hd - 1) // s + 1
    Wo = (Wd - 1) // s + 1

    # lane/sublane friendly padded sizes
    Cp = _round_up(Cin, 128)          # input channels  -> lane dim of x / matmul K
    Cpo = _round_up(Cout, 128)        # output channels -> lane dim of output
    Wo_p = _round_up(Wo, 8)           # output width    -> sublane aligned

    Hp = H + 2 * p
    RW = (Wo_p - 1) * s2 + K          # padded-input columns needed per tile

    # ---- pick the output-row tile TH (bounds acc size + input block size) ----
    in_itemsize = x_nchw.dtype.itemsize
    TH = max(1, Ho)
    while TH > 8 and (TH * Wo_p * Cp * 4 > _ACC_BUDGET_BYTES or
                      ((TH - 1) * s2 + K) * RW * Cp * in_itemsize
                      > _IN_BLOCK_BUDGET_BYTES):
        TH = (TH + 1) // 2
    T = (Ho + TH - 1) // TH
    RH = (TH - 1) * s2 + K            # halo'd input rows per tile

    # ---- wrapper glue (plain JAX): layout, zero pads, halo'd row-tile gather ----
    x_nhwc = jnp.transpose(x_nchw, (0, 2, 3, 1))                  # (N, H, W, Cin)
    pad_right = max(p, RW - W - p)
    x_pad = jnp.pad(x_nhwc, ((0, 0), (p, p), (p, pad_right), (0, Cp - Cin)))
    x_pad = x_pad[:, :, :RW, :]                                   # (N, Hp, RW, Cp)

    base = jnp.arange(T, dtype=jnp.int32) * (TH * s2)
    row_idx = jnp.minimum(base[:, None] + jnp.arange(RH, dtype=jnp.int32)[None, :],
                          Hp - 1)                                 # (T, RH), clamped tail
    x_tiles = x_pad[:, row_idx, :, :]                             # (N, T, RH, RW, Cp)

    # weights: zero-pad channels so padded lanes contribute exactly zero
    wdw = jnp.transpose(dw_w[:, 0, :, :], (1, 2, 0)).reshape(K * K, Cin)
    wdw = jnp.pad(wdw, ((0, 0), (0, Cp - Cin))).astype(jnp.float32)
    bdw = jnp.pad(dw_b, (0, Cp - Cin)).reshape(1, Cp).astype(jnp.float32)
    wpw = jnp.transpose(pw_w[:, :, 0, 0], (1, 0))                 # (Cin, Cout)
    wpw = jnp.pad(wpw, ((0, Cp - Cin), (0, Cpo - Cout))).astype(jnp.float32)
    bpw = jnp.pad(pw_b, (0, Cpo - Cout)).reshape(1, Cpo).astype(jnp.float32)

    kernel = functools.partial(_dws_kernel, K=K, s2=s2)

    flops = 2 * N * Ho * Wo * (K * K * Cin + Cin * Cout)
    bytes_accessed = (x_tiles.size * in_itemsize
                      + N * T * TH * Wo_p * Cpo * in_itemsize
                      + (wdw.size + bdw.size + wpw.size + bpw.size) * 4)

    out = pl.pallas_call(
        kernel,
        out_shape=jax.ShapeDtypeStruct((N, T * TH, Wo_p, Cpo), x_nchw.dtype),
        grid=(N, T),
        in_specs=[
            pl.BlockSpec((None, None, RH, RW, Cp), lambda n, t: (n, t, 0, 0, 0)),
            pl.BlockSpec((K * K, Cp), lambda n, t: (0, 0)),
            pl.BlockSpec((1, Cp), lambda n, t: (0, 0)),
            pl.BlockSpec((Cp, Cpo), lambda n, t: (0, 0)),
            pl.BlockSpec((1, Cpo), lambda n, t: (0, 0)),
        ],
        out_specs=pl.BlockSpec((None, TH, Wo_p, Cpo), lambda n, t: (n, t, 0, 0)),
        compiler_params=pltpu.CompilerParams(
            dimension_semantics=("parallel", "parallel"),
            vmem_limit_bytes=32 * 1024 * 1024),
        cost_estimate=pl.CostEstimate(flops=flops, transcendentals=0,
                                      bytes_accessed=bytes_accessed),
    )(x_tiles, wdw, bdw, wpw, bpw)

    out = out[:, :Ho, :Wo, :Cout]                                 # drop pad rows/cols/chans
    return jnp.transpose(out, (0, 3, 1, 2))                       # back to NCHW


def _reference(x, dw_w, dw_b, pw_w, pw_b, *, stride, padding):
    """Pure-JAX reference matching torch.nn.Conv2d semantics."""
    Cin = x.shape[1]
    dn = ("NCHW", "OIHW", "NCHW")
    dw = lax.conv_general_dilated(
        x, dw_w, window_strides=(stride, stride),
        padding=[(padding, padding), (padding, padding)],
        dimension_numbers=dn, feature_group_count=Cin)
    dw = dw + dw_b[None, :, None, None]
    pw = lax.conv_general_dilated(
        dw, pw_w, window_strides=(stride, stride),
        padding=[(0, 0), (0, 0)], dimension_numbers=dn)
    return pw + pw_b[None, :, None, None]


if __name__ == "__main__":
    key = jax.random.PRNGKey(0)
    K = 3
    configs = [
        # (N, Cin, Cout, H, W, stride, padding)
        (2, 4, 8, 16, 16, 1, 1),   # baseline
        (2, 4, 8, 16, 16, 2, 1),   # stride fused to s*s in both convs
        (1, 4, 8, 17, 17, 1, 1),   # odd spatial size -> row-tile tail + width padding
    ]

    for (N, Cin, Cout, H, W, stride, padding) in configs:
        kx, k1, k2, k3, k4 = jax.random.split(jax.random.fold_in(key, H * stride), 5)
        x = jax.random.normal(kx, (N, Cin, H, W), jnp.float32)
        dw_w = jax.random.normal(k1, (Cin, 1, K, K), jnp.float32) * 0.1
        dw_b = jax.random.normal(k2, (Cin,), jnp.float32) * 0.1
        pw_w = jax.random.normal(k3, (Cout, Cin, 1, 1), jnp.float32) * 0.1
        pw_b = jax.random.normal(k4, (Cout,), jnp.float32) * 0.1

        out = dws_convolution(x, dw_w, dw_b, pw_w, pw_b,
                              kernel_size=K, stride=stride, padding=padding)
        out = jax.block_until_ready(out)

        ref = _reference(x, dw_w, dw_b, pw_w, pw_b, stride=stride, padding=padding)
        assert out.shape == ref.shape, (out.shape, ref.shape)
        err = float(jnp.max(jnp.abs(out - ref)))
        assert jnp.allclose(out, ref, rtol=1e-4, atol=1e-4), (stride, H, err)

    print("KERNEL_OK")
</pallas_src>

<mosaic_0001>
module attributes {stable_mosaic.version = 11 : i64} {
  func.func @_dws_kernel(%arg0: i32, %arg1: i32, %arg2: memref<1x1x18x18x128xf32, #tpu.memory_space<vmem>>, %arg3: memref<9x128xf32, #tpu.memory_space<vmem>>, %arg4: memref<1x128xf32, #tpu.memory_space<vmem>>, %arg5: memref<128x128xf32, #tpu.memory_space<vmem>>, %arg6: memref<1x128xf32, #tpu.memory_space<vmem>>, %arg7: memref<1x16x16x128xf32, #tpu.memory_space<vmem>>) attributes {dimension_semantics = [#tpu.dimension_semantics<parallel>, #tpu.dimension_semantics<parallel>], iteration_bounds = array<i64: 2, 1>, scalar_prefetch = 0 : i64, scratch_operands = 0 : i64, tpu.core_type = #tpu.core_type<tc>, window_params = [{transform_indices = @transform_0, window_bounds = array<i64: 1, 1, 18, 18, 128>}, {pipeline_mode = #tpu.pipeline_mode<synchronous>, transform_indices = @transform_1, window_bounds = array<i64: 9, 128>}, {pipeline_mode = #tpu.pipeline_mode<synchronous>, transform_indices = @transform_2, window_bounds = array<i64: 1, 128>}, {pipeline_mode = #tpu.pipeline_mode<synchronous>, transform_indices = @transform_3, window_bounds = array<i64: 128, 128>}, {pipeline_mode = #tpu.pipeline_mode<synchronous>, transform_indices = @transform_4, window_bounds = array<i64: 1, 128>}, {transform_indices = @transform_5, window_bounds = array<i64: 1, 16, 16, 128>}]} {
    %cst = arith.constant 0.000000e+00 : f32
    %0 = vector.broadcast %cst : f32 to vector<16x16x128xf32>
    %c0 = arith.constant 0 : index
    %c0_0 = arith.constant 0 : index
    %c0_1 = arith.constant 0 : index
    %c0_2 = arith.constant 0 : index
    %c0_3 = arith.constant 0 : index
    %1 = vector.load %arg2[%c0, %c0_0, %c0_1, %c0_2, %c0_3] : memref<1x1x18x18x128xf32, #tpu.memory_space<vmem>>, vector<1x1x16x16x128xf32>
    %2 = vector.shape_cast %1 : vector<1x1x16x16x128xf32> to vector<16x16x128xf32>
    %c0_4 = arith.constant 0 : index
    %c0_5 = arith.constant 0 : index
    %3 = vector.load %arg3[%c0_4, %c0_5] : memref<9x128xf32, #tpu.memory_space<vmem>>, vector<1x128xf32>
    %4 = vector.shape_cast %3 : vector<1x128xf32> to vector<128xf32>
    %5 = vector.shape_cast %4 : vector<128xf32> to vector<1x1x128xf32>
    %6 = vector.broadcast %5 : vector<1x1x128xf32> to vector<16x16x128xf32>
    %7 = arith.mulf %2, %6 : vector<16x16x128xf32>
    %8 = arith.addf %0, %7 : vector<16x16x128xf32>
    %c0_6 = arith.constant 0 : index
    %c0_7 = arith.constant 0 : index
    %c0_8 = arith.constant 0 : index
    %c1 = arith.constant 1 : index
    %c0_9 = arith.constant 0 : index
    %9 = vector.load %arg2[%c0_6, %c0_7, %c0_8, %c1, %c0_9] : memref<1x1x18x18x128xf32, #tpu.memory_space<vmem>>, vector<1x1x16x16x128xf32>
    %10 = vector.shape_cast %9 : vector<1x1x16x16x128xf32> to vector<16x16x128xf32>
    %c1_10 = arith.constant 1 : index
    %c0_11 = arith.constant 0 : index
    %11 = vector.load %arg3[%c1_10, %c0_11] : memref<9x128xf32, #tpu.memory_space<vmem>>, vector<1x128xf32>
    %12 = vector.shape_cast %11 : vector<1x128xf32> to vector<128xf32>
    %13 = vector.shape_cast %12 : vector<128xf32> to vector<1x1x128xf32>
    %14 = vector.broadcast %13 : vector<1x1x128xf32> to vector<16x16x128xf32>
    %15 = arith.mulf %10, %14 : vector<16x16x128xf32>
    %16 = arith.addf %8, %15 : vector<16x16x128xf32>
    %c0_12 = arith.constant 0 : index
    %c0_13 = arith.constant 0 : index
    %c0_14 = arith.constant 0 : index
    %c2 = arith.constant 2 : index
    %c0_15 = arith.constant 0 : index
    %17 = vector.load %arg2[%c0_12, %c0_13, %c0_14, %c2, %c0_15] : memref<1x1x18x18x128xf32, #tpu.memory_space<vmem>>, vector<1x1x16x16x128xf32>
    %18 = vector.shape_cast %17 : vector<1x1x16x16x128xf32> to vector<16x16x128xf32>
    %c2_16 = arith.constant 2 : index
    %c0_17 = arith.constant 0 : index
    %19 = vector.load %arg3[%c2_16, %c0_17] : memref<9x128xf32, #tpu.memory_space<vmem>>, vector<1x128xf32>
    %20 = vector.shape_cast %19 : vector<1x128xf32> to vector<128xf32>
    %21 = vector.shape_cast %20 : vector<128xf32> to vector<1x1x128xf32>
    %22 = vector.broadcast %21 : vector<1x1x128xf32> to vector<16x16x128xf32>
    %23 = arith.mulf %18, %22 : vector<16x16x128xf32>
    %24 = arith.addf %16, %23 : vector<16x16x128xf32>
    %c0_18 = arith.constant 0 : index
    %c0_19 = arith.constant 0 : index
    %c1_20 = arith.constant 1 : index
    %c0_21 = arith.constant 0 : index
    %c0_22 = arith.constant 0 : index
    %25 = vector.load %arg2[%c0_18, %c0_19, %c1_20, %c0_21, %c0_22] : memref<1x1x18x18x128xf32, #tpu.memory_space<vmem>>, vector<1x1x16x16x128xf32>
    %26 = vector.shape_cast %25 : vector<1x1x16x16x128xf32> to vector<16x16x128xf32>
    %c3 = arith.constant 3 : index
    %c0_23 = arith.constant 0 : index
    %27 = vector.load %arg3[%c3, %c0_23] : memref<9x128xf32, #tpu.memory_space<vmem>>, vector<1x128xf32>
    %28 = vector.shape_cast %27 : vector<1x128xf32> to vector<128xf32>
    %29 = vector.shape_cast %28 : vector<128xf32> to vector<1x1x128xf32>
    %30 = vector.broadcast %29 : vector<1x1x128xf32> to vector<16x16x128xf32>
    %31 = arith.mulf %26, %30 : vector<16x16x128xf32>
    %32 = arith.addf %24, %31 : vector<16x16x128xf32>
    %c0_24 = arith.constant 0 : index
    %c0_25 = arith.constant 0 : index
    %c1_26 = arith.constant 1 : index
    %c1_27 = arith.constant 1 : index
    %c0_28 = arith.constant 0 : index
    %33 = vector.load %arg2[%c0_24, %c0_25, %c1_26, %c1_27, %c0_28] : memref<1x1x18x18x128xf32, #tpu.memory_space<vmem>>, vector<1x1x16x16x128xf32>
    %34 = vector.shape_cast %33 : vector<1x1x16x16x128xf32> to vector<16x16x128xf32>
    %c4 = arith.constant 4 : index
    %c0_29 = arith.constant 0 : index
    %35 = vector.load %arg3[%c4, %c0_29] : memref<9x128xf32, #tpu.memory_space<vmem>>, vector<1x128xf32>
    %36 = vector.shape_cast %35 : vector<1x128xf32> to vector<128xf32>
    %37 = vector.shape_cast %36 : vector<128xf32> to vector<1x1x128xf32>
    %38 = vector.broadcast %37 : vector<1x1x128xf32> to vector<16x16x128xf32>
    %39 = arith.mulf %34, %38 : vector<16x16x128xf32>
    %40 = arith.addf %32, %39 : vector<16x16x128xf32>
    %c0_30 = arith.constant 0 : index
    %c0_31 = arith.constant 0 : index
    %c1_32 = arith.constant 1 : index
    %c2_33 = arith.constant 2 : index
    %c0_34 = arith.constant 0 : index
    %41 = vector.load %arg2[%c0_30, %c0_31, %c1_32, %c2_33, %c0_34] : memref<1x1x18x18x128xf32, #tpu.memory_space<vmem>>, vector<1x1x16x16x128xf32>
    %42 = vector.shape_cast %41 : vector<1x1x16x16x128xf32> to vector<16x16x128xf32>
    %c5 = arith.constant 5 : index
    %c0_35 = arith.constant 0 : index
    %43 = vector.load %arg3[%c5, %c0_35] : memref<9x128xf32, #tpu.memory_space<vmem>>, vector<1x128xf32>
    %44 = vector.shape_cast %43 : vector<1x128xf32> to vector<128xf32>
    %45 = vector.shape_cast %44 : vector<128xf32> to vector<1x1x128xf32>
    %46 = vector.broadcast %45 : vector<1x1x128xf32> to vector<16x16x128xf32>
    %47 = arith.mulf %42, %46 : vector<16x16x128xf32>
    %48 = arith.addf %40, %47 : vector<16x16x128xf32>
    %c0_36 = arith.constant 0 : index
    %c0_37 = arith.constant 0 : index
    %c2_38 = arith.constant 2 : index
    %c0_39 = arith.constant 0 : index
    %c0_40 = arith.constant 0 : index
    %49 = vector.load %arg2[%c0_36, %c0_37, %c2_38, %c0_39, %c0_40] : memref<1x1x18x18x128xf32, #tpu.memory_space<vmem>>, vector<1x1x16x16x128xf32>
    %50 = vector.shape_cast %49 : vector<1x1x16x16x128xf32> to vector<16x16x128xf32>
    %c6 = arith.constant 6 : index
    %c0_41 = arith.constant 0 : index
    %51 = vector.load %arg3[%c6, %c0_41] : memref<9x128xf32, #tpu.memory_space<vmem>>, vector<1x128xf32>
    %52 = vector.shape_cast %51 : vector<1x128xf32> to vector<128xf32>
    %53 = vector.shape_cast %52 : vector<128xf32> to vector<1x1x128xf32>
    %54 = vector.broadcast %53 : vector<1x1x128xf32> to vector<16x16x128xf32>
    %55 = arith.mulf %50, %54 : vector<16x16x128xf32>
    %56 = arith.addf %48, %55 : vector<16x16x128xf32>
    %c0_42 = arith.constant 0 : index
    %c0_43 = arith.constant 0 : index
    %c2_44 = arith.constant 2 : index
    %c1_45 = arith.constant 1 : index
    %c0_46 = arith.constant 0 : index
    %57 = vector.load %arg2[%c0_42, %c0_43, %c2_44, %c1_45, %c0_46] : memref<1x1x18x18x128xf32, #tpu.memory_space<vmem>>, vector<1x1x16x16x128xf32>
    %58 = vector.shape_cast %57 : vector<1x1x16x16x128xf32> to vector<16x16x128xf32>
    %c7 = arith.constant 7 : index
    %c0_47 = arith.constant 0 : index
    %59 = vector.load %arg3[%c7, %c0_47] : memref<9x128xf32, #tpu.memory_space<vmem>>, vector<1x128xf32>
    %60 = vector.shape_cast %59 : vector<1x128xf32> to vector<128xf32>
    %61 = vector.shape_cast %60 : vector<128xf32> to vector<1x1x128xf32>
    %62 = vector.broadcast %61 : vector<1x1x128xf32> to vector<16x16x128xf32>
    %63 = arith.mulf %58, %62 : vector<16x16x128xf32>
    %64 = arith.addf %56, %63 : vector<16x16x128xf32>
    %c0_48 = arith.constant 0 : index
    %c0_49 = arith.constant 0 : index
    %c2_50 = arith.constant 2 : index
    %c2_51 = arith.constant 2 : index
    %c0_52 = arith.constant 0 : index
    %65 = vector.load %arg2[%c0_48, %c0_49, %c2_50, %c2_51, %c0_52] : memref<1x1x18x18x128xf32, #tpu.memory_space<vmem>>, vector<1x1x16x16x128xf32>
    %66 = vector.shape_cast %65 : vector<1x1x16x16x128xf32> to vector<16x16x128xf32>
    %c8 = arith.constant 8 : index
    %c0_53 = arith.constant 0 : index
    %67 = vector.load %arg3[%c8, %c0_53] : memref<9x128xf32, #tpu.memory_space<vmem>>, vector<1x128xf32>
    %68 = vector.shape_cast %67 : vector<1x128xf32> to vector<128xf32>
    %69 = vector.shape_cast %68 : vector<128xf32> to vector<1x1x128xf32>
    %70 = vector.broadcast %69 : vector<1x1x128xf32> to vector<16x16x128xf32>
    %71 = arith.mulf %66, %70 : vector<16x16x128xf32>
    %72 = arith.addf %64, %71 : vector<16x16x128xf32>
    %c0_54 = arith.constant 0 : index
    %c0_55 = arith.constant 0 : index
    %73 = vector.load %arg4[%c0_54, %c0_55] : memref<1x128xf32, #tpu.memory_space<vmem>>, vector<1x128xf32>
    %74 = vector.shape_cast %73 : vector<1x128xf32> to vector<128xf32>
    %75 = vector.shape_cast %74 : vector<128xf32> to vector<1x1x128xf32>
    %76 = vector.broadcast %75 : vector<1x1x128xf32> to vector<16x16x128xf32>
    %77 = arith.addf %72, %76 : vector<16x16x128xf32>
    %78 = vector.shape_cast %77 : vector<16x16x128xf32> to vector<256x128xf32>
    %c0_56 = arith.constant 0 : index
    %c0_57 = arith.constant 0 : index
    %79 = vector.load %arg5[%c0_56, %c0_57] : memref<128x128xf32, #tpu.memory_space<vmem>>, vector<128x128xf32>
    %cst_58 = arith.constant dense<0.000000e+00> : vector<256x128xf32>
    %80 = tpu.matmul %78, %79, %cst_58 {dimension_numbers = #tpu.dot_dimension_numbers<[1], [0], [0], [1], [0, 0, 1, 1], [], []>} : vector<256x128xf32>, vector<128x128xf32>, vector<256x128xf32> -> vector<256x128xf32>
    %c0_59 = arith.constant 0 : index
    %c0_60 = arith.constant 0 : index
    %81 = vector.load %arg6[%c0_59, %c0_60] : memref<1x128xf32, #tpu.memory_space<vmem>>, vector<1x128xf32>
    %82 = vector.shape_cast %81 : vector<1x128xf32> to vector<128xf32>
    %83 = vector.shape_cast %82 : vector<128xf32> to vector<1x128xf32>
    %84 = vector.broadcast %83 : vector<1x128xf32> to vector<256x128xf32>
    %85 = arith.addf %80, %84 : vector<256x128xf32>
    %86 = vector.shape_cast %85 : vector<256x128xf32> to vector<16x16x128xf32>
    %c0_61 = arith.constant 0 : index
    %c0_62 = arith.constant 0 : index
    %c0_63 = arith.constant 0 : index
    %c0_64 = arith.constant 0 : index
    %87 = vector.load %arg7[%c0_61, %c0_62, %c0_63, %c0_64] : memref<1x16x16x128xf32, #tpu.memory_space<vmem>>, vector<1x16x16x128xf32>
    %88 = vector.shape_cast %87 : vector<1x16x16x128xf32> to vector<16x16x128xf32>
    %89 = vector.shape_cast %86 : vector<16x16x128xf32> to vector<1x16x16x128xf32>
    tpu.vector_store %arg7[%c0_61, %c0_62, %c0_63, %c0_64], %89 {strides = array<i32>} : memref<1x16x16x128xf32, #tpu.memory_space<vmem>>, vector<1x16x16x128xf32>,
    return
  }
  func.func @transform_0(%arg0: i32, %arg1: i32) -> (i32, i32, i32, i32, i32) {
    %c0_i32 = arith.constant 0 : i32
    %c0_i32_0 = arith.constant 0 : i32
    %c0_i32_1 = arith.constant 0 : i32
    %c0_i32_2 = arith.constant 0 : i32
    return %arg0, %arg1, %c0_i32, %c0_i32_0, %c0_i32_1 : i32, i32, i32, i32, i32
  }
  func.func @transform_1(%arg0: i32, %arg1: i32) -> (i32, i32) {
    %c0_i32 = arith.constant 0 : i32
    %c0_i32_0 = arith.constant 0 : i32
    %c0_i32_1 = arith.constant 0 : i32
    return %c0_i32, %c0_i32_0 : i32, i32
  }
  func.func @transform_2(%arg0: i32, %arg1: i32) -> (i32, i32) {
    %c0_i32 = arith.constant 0 : i32
    %c0_i32_0 = arith.constant 0 : i32
    %c0_i32_1 = arith.constant 0 : i32
    return %c0_i32, %c0_i32_0 : i32, i32
  }
  func.func @transform_3(%arg0: i32, %arg1: i32) -> (i32, i32) {
    %c0_i32 = arith.constant 0 : i32
    %c0_i32_0 = arith.constant 0 : i32
    %c0_i32_1 = arith.constant 0 : i32
    return %c0_i32, %c0_i32_0 : i32, i32
  }
  func.func @transform_4(%arg0: i32, %arg1: i32) -> (i32, i32) {
    %c0_i32 = arith.constant 0 : i32
    %c0_i32_0 = arith.constant 0 : i32
    %c0_i32_1 = arith.constant 0 : i32
    return %c0_i32, %c0_i32_0 : i32, i32
  }
  func.func @transform_5(%arg0: i32, %arg1: i32) -> (i32, i32, i32, i32) {
    %c0_i32 = arith.constant 0 : i32
    %c0_i32_0 = arith.constant 0 : i32
    %c0_i32_1 = arith.constant 0 : i32
    return %arg0, %arg1, %c0_i32, %c0_i32_0 : i32, i32, i32, i32
  }
}

</mosaic_0001>

<llo_original>
// kernel: tpu_custom_call.1
$region0: #{tpu_custom_call.1}
  #allocation0 [shape = 'u32[]', space=smem, size = 0x4, offset = 0x4, fixed_abs, tag = 'smem constant byte address 0x4 - core index']
  #allocation1 [shape = 'u32[144,128]{1,0:T(1,128)}', space=vmem, size = 0x12000, scoped, tag = 'internal scratch']
  %s0 = inlined_call_operand.vmem [shape: f32[2,1,18,18,128], index: 0, kind: input, shape index: {}]
  %s1 = inlined_call_operand.vmem [shape: f32[9,128], index: 1, kind: input, shape index: {}]
  %s2 = inlined_call_operand.vmem [shape: f32[1,128], index: 2, kind: input, shape index: {}]
  %s3 = inlined_call_operand.vmem [shape: f32[128,128], index: 3, kind: input, shape index: {}]
  %s4 = inlined_call_operand.vmem [shape: f32[1,128], index: 4, kind: input, shape index: {}]
  %s5 = inlined_call_operand.hbm [shape: f32[2,16,16,128], index: 5, kind: output, shape index: {}]
  %s6 = sld [smem:[#allocation0]]
  $region53: #{tpu_custom_call.1} parent=0
    _
  %s8 = ssub.s32 1, %s6
  %s9 = scalar_select 0, %s8, %s6
  $region1: #{tpu_custom_call.1} parent=0
    #allocation2 [shape = 'u8[262144]{0}', space=vmem, size = 0x40000, scoped, tag = 'output window, operand 0']
    #allocation3 [shape = 's32[2]{0}', space=sflag, size = 0x8, scoped, tag = 'scoped memory for tpu_custom_call.1']
    %10 = vsyncpa [#allocation3], 0
    %s11 = scalar_lea.sflag [#allocation3], 1
    %12 = vsyncpa %s11, 0
    loop: start=0, step=1, limit=4
    $region2: #{tpu_custom_call.1} parent=1 // loop_pre_header
      _
    $region3: #{tpu_custom_call.1} parent=1 // loop_header
      %s14 = sphi 0, %s18
      %p15 = scmp.ge.s32.totalorder %s14, 4
      %s21 = sphi 0, %s33
      %s22 = sphi 0, %s29
      %s23 = sphi 0, %s21
      %s24 = sphi 0, %s22
      %s25 = sphi 0, %s23
      %s26 = sphi 0, %s24
      %s38 = sphi 0, %s40
      %s41 = sphi 0, %s38
      %s42 = sphi 0, %s41
      %s58 = sphi 0, %s42
      %s62 = sphi 0, %s62
      %s64 = sphi 0, %s62
      %s65 = sphi 0, %s64
      %s79 = sphi 0, %s65
      %s83 = sphi 0, %s83
      %s85 = sphi 0, %s83
      %s86 = sphi 0, %s85
      %s100 = sphi 0, %s86
      %s104 = sphi 0, %s104
      %s106 = sphi 0, %s104
      %s107 = sphi 0, %s106
      %s121 = sphi 0, %s107
      %s125 = sphi 0, %s125
      %s127 = sphi 0, %s125
      %s128 = sphi 0, %s127
      %s142 = sphi 0, %s128
      %s150 = sphi 0, %s152
      %s153 = sphi 0, %s150
      %s154 = sphi 0, %s153
      %s170 = sphi 0, %s154
    $region4: #{tpu_custom_call.1} parent=1 // loop_header_branch
      %17 = sbr.rel (%p15) target = $region8
    $region5: #{tpu_custom_call.1} parent=1 // loop_body
      %s19 = ssub.s32 %s14, 1
      %s20 = ssub.s32 %s14, 2
      %s27 = sadd.s32 1, %s22
      %p28 = scmp.ge.s32.totalorder %s27, 1
      %s29 = scalar_select %p28, 0, %s27
      %s30 = sadd.s32 1, %s21
      %s31 = scalar_select %p28, %s30, %s21
      %p32 = scmp.ge.s32.totalorder %s31, 2
      %s33 = scalar_select %p32, 0, %s31
      %s34 = ssub.s32 %s21, %s33
      %s35 = ssub.s32 %s22, %s29
      %s36 = sor.u32 %s34, %s35
      %p37 = scmp.eq.s32.totalorder %s36, 0
      %s39 = sadd.s32 %s38, 1
      %s40 = scalar_select %p37, %s38, %s39
      %p43 = pneg %p37
      %p44 = scmp.eq.s32.totalorder %s14, 1
      %p45 = por %p43, %p44
      %p46 = scmp.ne.s32.totalorder %s38, %s41
      %p47 = scmp.eq.s32.totalorder %s14, 0
      %p48 = por %p46, %p47
      %p49 = scmp.ne.s32.totalorder %s38, %s41
      %p50 = scmp.eq.s32.totalorder %s19, 1
      %p51 = por %p49, %p50
      %p52 = scmp.ne.s32.totalorder %s41, %s42
      %p53 = scmp.eq.s32.totalorder %s19, 0
      %p54 = por %p52, %p53
      %p55 = scmp.ne.s32.totalorder %s41, %s42
      %p56 = scmp.eq.s32.totalorder %s20, 1
      %p57 = por %p55, %p56
      %p59 = scmp.ne.s32.totalorder %s42, %s58
      %p60 = scmp.eq.s32.totalorder %s20, 0
      %p61 = por %p59, %p60
      %s63 = sadd.s32 %s62, 1
      %p66 = scmp.eq.s32.totalorder %s14, 1
      %p67 = scmp.ne.s32.totalorder %s62, %s64
      %p68 = scmp.eq.s32.totalorder %s14, 0
      %p69 = por %p67, %p68
      %p70 = scmp.ne.s32.totalorder %s62, %s64
      %p71 = scmp.eq.s32.totalorder %s19, 1
      %p72 = por %p70, %p71
      %p73 = scmp.ne.s32.totalorder %s64, %s65
      %p74 = scmp.eq.s32.totalorder %s19, 0
      %p75 = por %p73, %p74
      %p76 = scmp.ne.s32.totalorder %s64, %s65
      %p77 = scmp.eq.s32.totalorder %s20, 1
      %p78 = por %p76, %p77
      %p80 = scmp.ne.s32.totalorder %s65, %s79
      %p81 = scmp.eq.s32.totalorder %s20, 0
      %p82 = por %p80, %p81
      %s84 = sadd.s32 %s83, 1
      %p87 = scmp.eq.s32.totalorder %s14, 1
      %p88 = scmp.ne.s32.totalorder %s83, %s85
      %p89 = scmp.eq.s32.totalorder %s14, 0
      %p90 = por %p88, %p89
      %p91 = scmp.ne.s32.totalorder %s83, %s85
      %p92 = scmp.eq.s32.totalorder %s19, 1
      %p93 = por %p91, %p92
      %p94 = scmp.ne.s32.totalorder %s85, %s86
      %p95 = scmp.eq.s32.totalorder %s19, 0
      %p96 = por %p94, %p95
      %p97 = scmp.ne.s32.totalorder %s85, %s86
      %p98 = scmp.eq.s32.totalorder %s20, 1
      %p99 = por %p97, %p98
      %p101 = scmp.ne.s32.totalorder %s86, %s100
      %p102 = scmp.eq.s32.totalorder %s20, 0
      %p103 = por %p101, %p102
      %s105 = sadd.s32 %s104, 1
      %p108 = scmp.eq.s32.totalorder %s14, 1
      %p109 = scmp.ne.s32.totalorder %s104, %s106
      %p110 = scmp.eq.s32.totalorder %s14, 0
      %p111 = por %p109, %p110
      %p112 = scmp.ne.s32.totalorder %s104, %s106
      %p113 = scmp.eq.s32.totalorder %s19, 1
      %p114 = por %p112, %p113
      %p115 = scmp.ne.s32.totalorder %s106, %s107
      %p116 = scmp.eq.s32.totalorder %s19, 0
      %p117 = por %p115, %p116
      %p118 = scmp.ne.s32.totalorder %s106, %s107
      %p119 = scmp.eq.s32.totalorder %s20, 1
      %p120 = por %p118, %p119
      %p122 = scmp.ne.s32.totalorder %s107, %s121
      %p123 = scmp.eq.s32.totalorder %s20, 0
      %p124 = por %p122, %p123
      %s126 = sadd.s32 %s125, 1
      %p129 = scmp.eq.s32.totalorder %s14, 1
      %p130 = scmp.ne.s32.totalorder %s125, %s127
      %p131 = scmp.eq.s32.totalorder %s14, 0
      %p132 = por %p130, %p131
      %p133 = scmp.ne.s32.totalorder %s125, %s127
      %p134 = scmp.eq.s32.totalorder %s19, 1
      %p135 = por %p133, %p134
      %p136 = scmp.ne.s32.totalorder %s127, %s128
      %p137 = scmp.eq.s32.totalorder %s19, 0
      %p138 = por %p136, %p137
      %p139 = scmp.ne.s32.totalorder %s127, %s128
      %p140 = scmp.eq.s32.totalorder %s20, 1
      %p141 = por %p139, %p140
      %p143 = scmp.ne.s32.totalorder %s128, %s142
      %p144 = scmp.eq.s32.totalorder %s20, 0
      %p145 = por %p143, %p144
      %s146 = ssub.s32 %s21, %s33
      %s147 = ssub.s32 %s22, %s29
      %s148 = sor.u32 %s146, %s147
      %p149 = scmp.eq.s32.totalorder %s148, 0
      %s151 = sadd.s32 %s150, 1
      %s152 = scalar_select %p149, %s150, %s151
      %p155 = pneg %p149
      %p156 = scmp.eq.s32.totalorder %s14, 1
      %p157 = por %p155, %p156
      %p158 = scmp.ne.s32.totalorder %s150, %s153
      %p159 = scmp.eq.s32.totalorder %s14, 0
      %p160 = por %p158, %p159
      %p161 = scmp.ne.s32.totalorder %s150, %s153
      %p162 = scmp.eq.s32.totalorder %s19, 1
      %p163 = por %p161, %p162
      %p164 = scmp.ne.s32.totalorder %s153, %s154
      %p165 = scmp.eq.s32.totalorder %s19, 0
      %p166 = por %p164, %p165
      %p167 = scmp.ne.s32.totalorder %s153, %s154
      %p168 = scmp.eq.s32.totalorder %s20, 1
      %p169 = por %p167, %p168
      %p171 = scmp.ne.s32.totalorder %s154, %s170
      %p172 = scmp.eq.s32.totalorder %s20, 0
      %p173 = por %p171, %p172
      %p174 = scmp.le.s32.totalorder 1, %s14
      %p175 = scmp.lt.s32.totalorder %s14, 3
      %p176 = pnand %p174, %p175
      %p177 = pneg %p176
      // Predicated region
      $region9: #{tpu_custom_call.1} parent=5 // pred_check
        _
      $region10: #{tpu_custom_call.1} parent=5 // pred_check_branch
        %179 = sbr.rel (%p176) target = $region12
      $region11: #{tpu_custom_call.1} parent=5 // pred_region
        %s180 = ssub.s32 %s14, 1
        // Predicated region
        $region13: #{tpu_custom_call.1} parent=11 // pred_check
          %p181 = pneg %p75
        $region14: #{tpu_custom_call.1} parent=11 // pred_check_branch
          %183 = sbr.rel (%p181) target = $region16
        $region15: #{tpu_custom_call.1} parent=11 // pred_region
          _
        $region16: #{tpu_custom_call.1} parent=11 // pred_fallthru
          _
        // Predicated region
        $region17: #{tpu_custom_call.1} parent=11 // pred_check
          %p184 = pneg %p96
        $region18: #{tpu_custom_call.1} parent=11 // pred_check_branch
          %186 = sbr.rel (%p184) target = $region20
        $region19: #{tpu_custom_call.1} parent=11 // pred_region
          _
        $region20: #{tpu_custom_call.1} parent=11 // pred_fallthru
          _
        // Predicated region
        $region21: #{tpu_custom_call.1} parent=11 // pred_check
          %p187 = pneg %p117
        $region22: #{tpu_custom_call.1} parent=11 // pred_check_branch
          %189 = sbr.rel (%p187) target = $region24
        $region23: #{tpu_custom_call.1} parent=11 // pred_region
          _
        $region24: #{tpu_custom_call.1} parent=11 // pred_fallthru
          _
        // Predicated region
        $region25: #{tpu_custom_call.1} parent=11 // pred_check
          %p190 = pneg %p138
        $region26: #{tpu_custom_call.1} parent=11 // pred_check_branch
          %192 = sbr.rel (%p190) target = $region28
        $region27: #{tpu_custom_call.1} parent=11 // pred_region
          _
        $region28: #{tpu_custom_call.1} parent=11 // pred_fallthru
          _
      $region12: #{tpu_custom_call.1} parent=5 // pred_fallthru
        _
      %p193 = scmp.lt.s32.totalorder %s14, 2
      // Predicated region
      $region29: #{tpu_custom_call.1} parent=5 // pred_check
        %p194 = pneg %p193
      $region30: #{tpu_custom_call.1} parent=5 // pred_check_branch
        %196 = sbr.rel (%p194) target = $region32
      $region31: #{tpu_custom_call.1} parent=5 // pred_region
        // Predicated region
        $region33: #{tpu_custom_call.1} parent=31 // pred_check
          %p197 = pneg %p48
        $region34: #{tpu_custom_call.1} parent=31 // pred_check_branch
          %199 = sbr.rel (%p197) target = $region36
        $region35: #{tpu_custom_call.1} parent=31 // pred_region
          %p200 = scmp.lt.s32.totalorder %s21, 1
          %s201 = scalar_select %p200, %s21, 1
          %p202 = scmp.lt.s32.totalorder %s22, 0
          %s203 = scalar_select %p202, %s22, 0
          %s204 = smul.addr %s203, 54
          %s205 = smul.addr %s201, 54
          %s206 = sadd.s32 %s204, %s205
          %s207 = smul.addr %s206, 8
          %s208 = scalar_lea.vmem %s0, %s207
        $region36: #{tpu_custom_call.1} parent=31 // pred_fallthru
          _
      $region32: #{tpu_custom_call.1} parent=5 // pred_fallthru
        _
      %p209 = scmp.le.s32.totalorder 1, %s14
      %p210 = scmp.lt.s32.totalorder %s14, 3
      %p211 = pnand %p209, %p210
      %p212 = pneg %p211
      // Predicated region
      $region37: #{tpu_custom_call.1} parent=5 // pred_check
        _
      $region38: #{tpu_custom_call.1} parent=5 // pred_check_branch
        %214 = sbr.rel (%p211) target = $region40
      $region39: #{tpu_custom_call.1} parent=5 // pred_region
        %s215 = ssub.s32 %s14, 1
        %p216 = scmp.lt.s32.totalorder %s23, 1
        %s217 = scalar_select %p216, %s23, 1
        %p218 = scmp.lt.s32.totalorder %s24, 0
        %s219 = scalar_select %p218, %s24, 0
        %s220 = smul.addr %s219, 54
        %s221 = smul.addr %s217, 54
        %s222 = sadd.s32 %s220, %s221
        %s223 = smul.addr %s222, 8
        %s224 = scalar_lea.vmem %s0, %s223
        %p225 = pneg %p54
        %p226 = pneg %p51
        %p227 = pneg %p75
        %p228 = pneg %p72
        %p229 = pneg %p96
        %p230 = pneg %p93
        %p231 = pneg %p117
        %p232 = pneg %p114
        %p233 = pneg %p138
        %p234 = pneg %p135
        %p235 = pneg %p166
        %p236 = pneg %p163
        %s237 = sand.u32 %s153, 1
        %s238 = scalar_lea.sflag [#allocation3], %s237
        %s239 = sand.u32 %s153, 1
        %s240 = smul.addr %s239, 256
        %s241 = scalar_lea.vmem [#allocation2], %s240
        %p242 = scmp.lt.s32.totalorder %s23, 1
        %s243 = scalar_select %p242, %s23, 1
        %p244 = scmp.lt.s32.totalorder %s24, 0
        %s245 = scalar_select %p244, %s24, 0
        %s246 = smul.addr %s245, 54
        %s247 = smul.addr %s243, 54
        %s248 = sadd.s32 %s246, %s247
        %s249 = smul.addr %s248, 8
        %s250 = scalar_lea.vmem %s0, %s249
        %s251 = smul.u32 16, %s24
        %v252 = vld [vmem:[%s250] sm:$0xff]
        %v253 = vld [vmem:[%s250 + $0x8] sm:$0xff]
        %v254 = vld [vmem:[%s250 + $0x18] sm:$0xff]
        %v255 = vld [vmem:[%s250 + $0x20] sm:$0xff]
        %v256 = vld [vmem:[%s250 + $0x30] sm:$0xff]
        %v257 = vld [vmem:[%s250 + $0x38] sm:$0xff]
        %v258 = vld [vmem:[%s250 + $0x48] sm:$0xff]
        %v259 = vld [vmem:[%s250 + $0x50] sm:$0xff]
        %v260 = vld [vmem:[%s250 + $0x60] sm:$0xff]
        %v261 = vld [vmem:[%s250 + $0x68] sm:$0xff]
        %v262 = vld [vmem:[%s250 + $0x78] sm:$0xff]
        %v263 = vld [vmem:[%s250 + $0x80] sm:$0xff]
        %v264 = vld [vmem:[%s250 + $0x90] sm:$0xff]
        %v265 = vld [vmem:[%s250 + $0x98] sm:$0xff]
        %v266 = vld [vmem:[%s250 + $0xa8] sm:$0xff]
        %v267 = vld [vmem:[%s250 + $0xb0] sm:$0xff]
        %v268 = vld [vmem:[%s250 + $0xc0] sm:$0xff]
        %v269 = vld [vmem:[%s250 + $0xc8] sm:$0xff]
        %v270 = vld [vmem:[%s250 + $0xd8] sm:$0xff]
        %v271 = vld [vmem:[%s250 + $0xe0] sm:$0xff]
        %v272 = vld [vmem:[%s250 + $0xf0] sm:$0xff]
        %v273 = vld [vmem:[%s250 + $0xf8] sm:$0xff]
        %v274 = vld [vmem:[%s250 + $0x108] sm:$0xff]
        %v275 = vld [vmem:[%s250 + $0x110] sm:$0xff]
        %v276 = vld [vmem:[%s250 + $0x120] sm:$0xff]
        %v277 = vld [vmem:[%s250 + $0x128] sm:$0xff]
        %v278 = vld [vmem:[%s250 + $0x138] sm:$0xff]
        %v279 = vld [vmem:[%s250 + $0x140] sm:$0xff]
        %v280 = vld [vmem:[%s250 + $0x150] sm:$0xff]
        %v281 = vld [vmem:[%s250 + $0x158] sm:$0xff]
        %v282 = vld [vmem:[%s250 + $0x168] sm:$0xff]
        %v283 = vld [vmem:[%s250 + $0x170] sm:$0xff]
        %v284 = vld [vmem:[%s1] sm:$0x1]
        %v285 = vlaneseq
        %v286 = vshrl.u32 %v285, 7
        %v287 = vsub.s32 0, %v286
        %v288 = vrot.slane %v284, %v287
        %v289 = vmul.f32 %v252, %v288
        %v290 = vmul.f32 %v253, %v288
        %v291 = vmul.f32 %v254, %v288
        %v292 = vmul.f32 %v255, %v288
        %v293 = vmul.f32 %v256, %v288
        %v294 = vmul.f32 %v257, %v288
        %v295 = vmul.f32 %v258, %v288
        %v296 = vmul.f32 %v259, %v288
        %v297 = vmul.f32 %v260, %v288
        %v298 = vmul.f32 %v261, %v288
        %v299 = vmul.f32 %v262, %v288
        %v300 = vmul.f32 %v263, %v288
        %v301 = vmul.f32 %v264, %v288
        %v302 = vmul.f32 %v265, %v288
        %v303 = vmul.f32 %v266, %v288
        %v304 = vmul.f32 %v267, %v288
        %v305 = vmul.f32 %v268, %v288
        %v306 = vmul.f32 %v269, %v288
        %v307 = vmul.f32 %v270, %v288
        %v308 = vmul.f32 %v271, %v288
        %v309 = vmul.f32 %v272, %v288
        %v310 = vmul.f32 %v273, %v288
        %v311 = vmul.f32 %v274, %v288
        %v312 = vmul.f32 %v275, %v288
        %v313 = vmul.f32 %v276, %v288
        %v314 = vmul.f32 %v277, %v288
        %v315 = vmul.f32 %v278, %v288
        %v316 = vmul.f32 %v279, %v288
        %v317 = vmul.f32 %v280, %v288
        %v318 = vmul.f32 %v281, %v288
        %v319 = vmul.f32 %v282, %v288
        %v320 = vmul.f32 %v283, %v288
        %v321 = vadd.f32 %v289, 0.0
        %v322 = vadd.f32 %v290, 0.0
        %v323 = vadd.f32 %v291, 0.0
        %v324 = vadd.f32 %v292, 0.0
        %v325 = vadd.f32 %v293, 0.0
        %v326 = vadd.f32 %v294, 0.0
        %v327 = vadd.f32 %v295, 0.0
        %v328 = vadd.f32 %v296, 0.0
        %v329 = vadd.f32 %v297, 0.0
        %v330 = vadd.f32 %v298, 0.0
        %v331 = vadd.f32 %v299, 0.0
        %v332 = vadd.f32 %v300, 0.0
        %v333 = vadd.f32 %v301, 0.0
        %v334 = vadd.f32 %v302, 0.0
        %v335 = vadd.f32 %v303, 0.0
        %v336 = vadd.f32 %v304, 0.0
        %v337 = vadd.f32 %v305, 0.0
        %v338 = vadd.f32 %v306, 0.0
        %v339 = vadd.f32 %v307, 0.0
        %v340 = vadd.f32 %v308, 0.0
        %v341 = vadd.f32 %v309, 0.0
        %v342 = vadd.f32 %v310, 0.0
        %v343 = vadd.f32 %v311, 0.0
        %v344 = vadd.f32 %v312, 0.0
        %v345 = vadd.f32 %v313, 0.0
        %v346 = vadd.f32 %v314, 0.0
        %v347 = vadd.f32 %v315, 0.0
        %v348 = vadd.f32 %v316, 0.0
        %v349 = vadd.f32 %v317, 0.0
        %v350 = vadd.f32 %v318, 0.0
        %v351 = vadd.f32 %v319, 0.0
        %v352 = vadd.f32 %v320, 0.0
        %v353 = vld [vmem:[%s250 + $0x1] sm:$0xff]
        %v354 = vld [vmem:[%s250 + $0x9] sm:$0xff]
        %v355 = vld [vmem:[%s250 + $0x19] sm:$0xff]
        %v356 = vld [vmem:[%s250 + $0x21] sm:$0xff]
        %v357 = vld [vmem:[%s250 + $0x31] sm:$0xff]
        %v358 = vld [vmem:[%s250 + $0x39] sm:$0xff]
        %v359 = vld [vmem:[%s250 + $0x49] sm:$0xff]
        %v360 = vld [vmem:[%s250 + $0x51] sm:$0xff]
        %v361 = vld [vmem:[%s250 + $0x61] sm:$0xff]
        %v362 = vld [vmem:[%s250 + $0x69] sm:$0xff]
        %v363 = vld [vmem:[%s250 + $0x79] sm:$0xff]
        %v364 = vld [vmem:[%s250 + $0x81] sm:$0xff]
        %v365 = vld [vmem:[%s250 + $0x91] sm:$0xff]
        %v366 = vld [vmem:[%s250 + $0x99] sm:$0xff]
        %v367 = vld [vmem:[%s250 + $0xa9] sm:$0xff]
        %v368 = vld [vmem:[%s250 + $0xb1] sm:$0xff]
        %v369 = vld [vmem:[%s250 + $0xc1] sm:$0xff]
        %v370 = vld [vmem:[%s250 + $0xc9] sm:$0xff]
        %v371 = vld [vmem:[%s250 + $0xd9] sm:$0xff]
        %v372 = vld [vmem:[%s250 + $0xe1] sm:$0xff]
        %v373 = vld [vmem:[%s250 + $0xf1] sm:$0xff]
        %v374 = vld [vmem:[%s250 + $0xf9] sm:$0xff]
        %v375 = vld [vmem:[%s250 + $0x109] sm:$0xff]
        %v376 = vld [vmem:[%s250 + $0x111] sm:$0xff]
        %v377 = vld [vmem:[%s250 + $0x121] sm:$0xff]
        %v378 = vld [vmem:[%s250 + $0x129] sm:$0xff]
        %v379 = vld [vmem:[%s250 + $0x139] sm:$0xff]
        %v380 = vld [vmem:[%s250 + $0x141] sm:$0xff]
        %v381 = vld [vmem:[%s250 + $0x151] sm:$0xff]
        %v382 = vld [vmem:[%s250 + $0x159] sm:$0xff]
        %v383 = vld [vmem:[%s250 + $0x169] sm:$0xff]
        %v384 = vld [vmem:[%s250 + $0x171] sm:$0xff]
        %v385 = vld [vmem:[%s1 + $0x1] sm:$0x1]
        %v386 = vlaneseq
        %v387 = vshrl.u32 %v386, 7
        %v388 = vsub.s32 0, %v387
        %v389 = vrot.slane %v385, %v388
        %v390 = vmul.f32 %v353, %v389
        %v391 = vmul.f32 %v354, %v389
        %v392 = vmul.f32 %v355, %v389
        %v393 = vmul.f32 %v356, %v389
        %v394 = vmul.f32 %v357, %v389
        %v395 = vmul.f32 %v358, %v389
        %v396 = vmul.f32 %v359, %v389
        %v397 = vmul.f32 %v360, %v389
        %v398 = vmul.f32 %v361, %v389
        %v399 = vmul.f32 %v362, %v389
        %v400 = vmul.f32 %v363, %v389
        %v401 = vmul.f32 %v364, %v389
        %v402 = vmul.f32 %v365, %v389
        %v403 = vmul.f32 %v366, %v389
        %v404 = vmul.f32 %v367, %v389
        %v405 = vmul.f32 %v368, %v389
        %v406 = vmul.f32 %v369, %v389
        %v407 = vmul.f32 %v370, %v389
        %v408 = vmul.f32 %v371, %v389
        %v409 = vmul.f32 %v372, %v389
        %v410 = vmul.f32 %v373, %v389
        %v411 = vmul.f32 %v374, %v389
        %v412 = vmul.f32 %v375, %v389
        %v413 = vmul.f32 %v376, %v389
        %v414 = vmul.f32 %v377, %v389
        %v415 = vmul.f32 %v378, %v389
        %v416 = vmul.f32 %v379, %v389
        %v417 = vmul.f32 %v380, %v389
        %v418 = vmul.f32 %v381, %v389
        %v419 = vmul.f32 %v382, %v389
        %v420 = vmul.f32 %v383, %v389
        %v421 = vmul.f32 %v384, %v389
        %v422 = vadd.f32 %v321, %v390
        %v423 = vadd.f32 %v322, %v391
        %v424 = vadd.f32 %v323, %v392
        %v425 = vadd.f32 %v324, %v393
        %v426 = vadd.f32 %v325, %v394
        %v427 = vadd.f32 %v326, %v395
        %v428 = vadd.f32 %v327, %v396
        %v429 = vadd.f32 %v328, %v397
        %v430 = vadd.f32 %v329, %v398
        %v431 = vadd.f32 %v330, %v399
        %v432 = vadd.f32 %v331, %v400
        %v433 = vadd.f32 %v332, %v401
        %v434 = vadd.f32 %v333, %v402
        %v435 = vadd.f32 %v334, %v403
        %v436 = vadd.f32 %v335, %v404
        %v437 = vadd.f32 %v336, %v405
        %v438 = vadd.f32 %v337, %v406
        %v439 = vadd.f32 %v338, %v407
        %v440 = vadd.f32 %v339, %v408
        %v441 = vadd.f32 %v340, %v409
        %v442 = vadd.f32 %v341, %v410
        %v443 = vadd.f32 %v342, %v411
        %v444 = vadd.f32 %v343, %v412
        %v445 = vadd.f32 %v344, %v413
        %v446 = vadd.f32 %v345, %v414
        %v447 = vadd.f32 %v346, %v415
        %v448 = vadd.f32 %v347, %v416
        %v449 = vadd.f32 %v348, %v417
        %v450 = vadd.f32 %v349, %v418
        %v451 = vadd.f32 %v350, %v419
        %v452 = vadd.f32 %v351, %v420
        %v453 = vadd.f32 %v352, %v421
        %v454 = vld [vmem:[%s250 + $0x2] sm:$0xff]
        %v455 = vld [vmem:[%s250 + $0xa] sm:$0xff]
        %v456 = vld [vmem:[%s250 + $0x1a] sm:$0xff]
        %v457 = vld [vmem:[%s250 + $0x22] sm:$0xff]
        %v458 = vld [vmem:[%s250 + $0x32] sm:$0xff]
        %v459 = vld [vmem:[%s250 + $0x3a] sm:$0xff]
        %v460 = vld [vmem:[%s250 + $0x4a] sm:$0xff]
        %v461 = vld [vmem:[%s250 + $0x52] sm:$0xff]
        %v462 = vld [vmem:[%s250 + $0x62] sm:$0xff]
        %v463 = vld [vmem:[%s250 + $0x6a] sm:$0xff]
        %v464 = vld [vmem:[%s250 + $0x7a] sm:$0xff]
        %v465 = vld [vmem:[%s250 + $0x82] sm:$0xff]
        %v466 = vld [vmem:[%s250 + $0x92] sm:$0xff]
        %v467 = vld [vmem:[%s250 + $0x9a] sm:$0xff]
        %v468 = vld [vmem:[%s250 + $0xaa] sm:$0xff]
        %v469 = vld [vmem:[%s250 + $0xb2] sm:$0xff]
        %v470 = vld [vmem:[%s250 + $0xc2] sm:$0xff]
        %v471 = vld [vmem:[%s250 + $0xca] sm:$0xff]
        %v472 = vld [vmem:[%s250 + $0xda] sm:$0xff]
        %v473 = vld [vmem:[%s250 + $0xe2] sm:$0xff]
        %v474 = vld [vmem:[%s250 + $0xf2] sm:$0xff]
        %v475 = vld [vmem:[%s250 + $0xfa] sm:$0xff]
        %v476 = vld [vmem:[%s250 + $0x10a] sm:$0xff]
        %v477 = vld [vmem:[%s250 + $0x112] sm:$0xff]
        %v478 = vld [vmem:[%s250 + $0x122] sm:$0xff]
        %v479 = vld [vmem:[%s250 + $0x12a] sm:$0xff]
        %v480 = vld [vmem:[%s250 + $0x13a] sm:$0xff]
        %v481 = vld [vmem:[%s250 + $0x142] sm:$0xff]
        %v482 = vld [vmem:[%s250 + $0x152] sm:$0xff]
        %v483 = vld [vmem:[%s250 + $0x15a] sm:$0xff]
        %v484 = vld [vmem:[%s250 + $0x16a] sm:$0xff]
        %v485 = vld [vmem:[%s250 + $0x172] sm:$0xff]
        %v486 = vld [vmem:[%s1 + $0x2] sm:$0x1]
        %v487 = vlaneseq
        %v488 = vshrl.u32 %v487, 7
        %v489 = vsub.s32 0, %v488
        %v490 = vrot.slane %v486, %v489
        %v491 = vmul.f32 %v454, %v490
        %v492 = vmul.f32 %v455, %v490
        %v493 = vmul.f32 %v456, %v490
        %v494 = vmul.f32 %v457, %v490
        %v495 = vmul.f32 %v458, %v490
        %v496 = vmul.f32 %v459, %v490
        %v497 = vmul.f32 %v460, %v490
        %v498 = vmul.f32 %v461, %v490
        %v499 = vmul.f32 %v462, %v490
        %v500 = vmul.f32 %v463, %v490
        %v501 = vmul.f32 %v464, %v490
        %v502 = vmul.f32 %v465, %v490
        %v503 = vmul.f32 %v466, %v490
        %v504 = vmul.f32 %v467, %v490
        %v505 = vmul.f32 %v468, %v490
        %v506 = vmul.f32 %v469, %v490
        %v507 = vmul.f32 %v470, %v490
        %v508 = vmul.f32 %v471, %v490
        %v509 = vmul.f32 %v472, %v490
        %v510 = vmul.f32 %v473, %v490
        %v511 = vmul.f32 %v474, %v490
        %v512 = vmul.f32 %v475, %v490
        %v513 = vmul.f32 %v476, %v490
        %v514 = vmul.f32 %v477, %v490
        %v515 = vmul.f32 %v478, %v490
        %v516 = vmul.f32 %v479, %v490
        %v517 = vmul.f32 %v480, %v490
        %v518 = vmul.f32 %v481, %v490
        %v519 = vmul.f32 %v482, %v490
        %v520 = vmul.f32 %v483, %v490
        %v521 = vmul.f32 %v484, %v490
        %v522 = vmul.f32 %v485, %v490
        %v523 = vadd.f32 %v422, %v491
        %v524 = vadd.f32 %v423, %v492
        %v525 = vadd.f32 %v424, %v493
        %v526 = vadd.f32 %v425, %v494
        %v527 = vadd.f32 %v426, %v495
        %v528 = vadd.f32 %v427, %v496
        %v529 = vadd.f32 %v428, %v497
        %v530 = vadd.f32 %v429, %v498
        %v531 = vadd.f32 %v430, %v499
        %v532 = vadd.f32 %v431, %v500
        %v533 = vadd.f32 %v432, %v501
        %v534 = vadd.f32 %v433, %v502
        %v535 = vadd.f32 %v434, %v503
        %v536 = vadd.f32 %v435, %v504
        %v537 = vadd.f32 %v436, %v505
        %v538 = vadd.f32 %v437, %v506
        %v539 = vadd.f32 %v438, %v507
        %v540 = vadd.f32 %v439, %v508
        %v541 = vadd.f32 %v440, %v509
        %v542 = vadd.f32 %v441, %v510
        %v543 = vadd.f32 %v442, %v511
        %v544 = vadd.f32 %v443, %v512
        %v545 = vadd.f32 %v444, %v513
        %v546 = vadd.f32 %v445, %v514
        %v547 = vadd.f32 %v446, %v515
        %v548 = vadd.f32 %v447, %v516
        %v549 = vadd.f32 %v448, %v517
        %v550 = vadd.f32 %v449, %v518
        %v551 = vadd.f32 %v450, %v519
        %v552 = vadd.f32 %v451, %v520
        %v553 = vadd.f32 %v452, %v521
        %v554 = vadd.f32 %v453, %v522
        %s555 = scalar_lea.vmem %s250, 24
        %v556 = vld [vmem:[%s555] sm:$0xff]
        %v557 = vld [vmem:[%s555 + $0x8] sm:$0xff]
        %v558 = vld [vmem:[%s555 + $0x18] sm:$0xff]
        %v559 = vld [vmem:[%s555 + $0x20] sm:$0xff]
        %v560 = vld [vmem:[%s555 + $0x30] sm:$0xff]
        %v561 = vld [vmem:[%s555 + $0x38] sm:$0xff]
        %v562 = vld [vmem:[%s555 + $0x48] sm:$0xff]
        %v563 = vld [vmem:[%s555 + $0x50] sm:$0xff]
        %v564 = vld [vmem:[%s555 + $0x60] sm:$0xff]
        %v565 = vld [vmem:[%s555 + $0x68] sm:$0xff]
        %v566 = vld [vmem:[%s555 + $0x78] sm:$0xff]
        %v567 = vld [vmem:[%s555 + $0x80] sm:$0xff]
        %v568 = vld [vmem:[%s555 + $0x90] sm:$0xff]
        %v569 = vld [vmem:[%s555 + $0x98] sm:$0xff]
        %v570 = vld [vmem:[%s555 + $0xa8] sm:$0xff]
        %v571 = vld [vmem:[%s555 + $0xb0] sm:$0xff]
        %v572 = vld [vmem:[%s555 + $0xc0] sm:$0xff]
        %v573 = vld [vmem:[%s555 + $0xc8] sm:$0xff]
        %v574 = vld [vmem:[%s555 + $0xd8] sm:$0xff]
        %v575 = vld [vmem:[%s555 + $0xe0] sm:$0xff]
        %v576 = vld [vmem:[%s555 + $0xf0] sm:$0xff]
        %v577 = vld [vmem:[%s555 + $0xf8] sm:$0xff]
        %v578 = vld [vmem:[%s555 + $0x108] sm:$0xff]
        %v579 = vld [vmem:[%s555 + $0x110] sm:$0xff]
        %v580 = vld [vmem:[%s555 + $0x120] sm:$0xff]
        %v581 = vld [vmem:[%s555 + $0x128] sm:$0xff]
        %v582 = vld [vmem:[%s555 + $0x138] sm:$0xff]
        %v583 = vld [vmem:[%s555 + $0x140] sm:$0xff]
        %v584 = vld [vmem:[%s555 + $0x150] sm:$0xff]
        %v585 = vld [vmem:[%s555 + $0x158] sm:$0xff]
        %v586 = vld [vmem:[%s555 + $0x168] sm:$0xff]
        %v587 = vld [vmem:[%s555 + $0x170] sm:$0xff]
        %v588 = vld [vmem:[%s1 + $0x3] sm:$0x1]
        %v589 = vlaneseq
        %v590 = vshrl.u32 %v589, 7
        %v591 = vsub.s32 0, %v590
        %v592 = vrot.slane %v588, %v591
        %v593 = vmul.f32 %v556, %v592
        %v594 = vmul.f32 %v557, %v592
        %v595 = vmul.f32 %v558, %v592
        %v596 = vmul.f32 %v559, %v592
        %v597 = vmul.f32 %v560, %v592
        %v598 = vmul.f32 %v561, %v592
        %v599 = vmul.f32 %v562, %v592
        %v600 = vmul.f32 %v563, %v592
        %v601 = vmul.f32 %v564, %v592
        %v602 = vmul.f32 %v565, %v592
        %v603 = vmul.f32 %v566, %v592
        %v604 = vmul.f32 %v567, %v592
        %v605 = vmul.f32 %v568, %v592
        %v606 = vmul.f32 %v569, %v592
        %v607 = vmul.f32 %v570, %v592
        %v608 = vmul.f32 %v571, %v592
        %v609 = vmul.f32 %v572, %v592
        %v610 = vmul.f32 %v573, %v592
        %v611 = vmul.f32 %v574, %v592
        %v612 = vmul.f32 %v575, %v592
        %v613 = vmul.f32 %v576, %v592
        %v614 = vmul.f32 %v577, %v592
        %v615 = vmul.f32 %v578, %v592
        %v616 = vmul.f32 %v579, %v592
        %v617 = vmul.f32 %v580, %v592
        %v618 = vmul.f32 %v581, %v592
        %v619 = vmul.f32 %v582, %v592
        %v620 = vmul.f32 %v583, %v592
        %v621 = vmul.f32 %v584, %v592
        %v622 = vmul.f32 %v585, %v592
        %v623 = vmul.f32 %v586, %v592
        %v624 = vmul.f32 %v587, %v592
        %v625 = vadd.f32 %v523, %v593
        %v626 = vadd.f32 %v524, %v594
        %v627 = vadd.f32 %v525, %v595
        %v628 = vadd.f32 %v526, %v596
        %v629 = vadd.f32 %v527, %v597
        %v630 = vadd.f32 %v528, %v598
        %v631 = vadd.f32 %v529, %v599
        %v632 = vadd.f32 %v530, %v600
        %v633 = vadd.f32 %v531, %v601
        %v634 = vadd.f32 %v532, %v602
        %v635 = vadd.f32 %v533, %v603
        %v636 = vadd.f32 %v534, %v604
        %v637 = vadd.f32 %v535, %v605
        %v638 = vadd.f32 %v536, %v606
        %v639 = vadd.f32 %v537, %v607
        %v640 = vadd.f32 %v538, %v608
        %v641 = vadd.f32 %v539, %v609
        %v642 = vadd.f32 %v540, %v610
        %v643 = vadd.f32 %v541, %v611
        %v644 = vadd.f32 %v542, %v612
        %v645 = vadd.f32 %v543, %v613
        %v646 = vadd.f32 %v544, %v614
        %v647 = vadd.f32 %v545, %v615
        %v648 = vadd.f32 %v546, %v616
        %v649 = vadd.f32 %v547, %v617
        %v650 = vadd.f32 %v548, %v618
        %v651 = vadd.f32 %v549, %v619
        %v652 = vadd.f32 %v550, %v620
        %v653 = vadd.f32 %v551, %v621
        %v654 = vadd.f32 %v552, %v622
        %v655 = vadd.f32 %v553, %v623
        %v656 = vadd.f32 %v554, %v624
        %v657 = vld [vmem:[%s555 + $0x1] sm:$0xff]
        %v658 = vld [vmem:[%s555 + $0x9] sm:$0xff]
        %v659 = vld [vmem:[%s555 + $0x19] sm:$0xff]
        %v660 = vld [vmem:[%s555 + $0x21] sm:$0xff]
        %v661 = vld [vmem:[%s555 + $0x31] sm:$0xff]
        %v662 = vld [vmem:[%s555 + $0x39] sm:$0xff]
        %v663 = vld [vmem:[%s555 + $0x49] sm:$0xff]
        %v664 = vld [vmem:[%s555 + $0x51] sm:$0xff]
        %v665 = vld [vmem:[%s555 + $0x61] sm:$0xff]
        %v666 = vld [vmem:[%s555 + $0x69] sm:$0xff]
        %v667 = vld [vmem:[%s555 + $0x79] sm:$0xff]
        %v668 = vld [vmem:[%s555 + $0x81] sm:$0xff]
        %v669 = vld [vmem:[%s555 + $0x91] sm:$0xff]
        %v670 = vld [vmem:[%s555 + $0x99] sm:$0xff]
        %v671 = vld [vmem:[%s555 + $0xa9] sm:$0xff]
        %v672 = vld [vmem:[%s555 + $0xb1] sm:$0xff]
        %v673 = vld [vmem:[%s555 + $0xc1] sm:$0xff]
        %v674 = vld [vmem:[%s555 + $0xc9] sm:$0xff]
        %v675 = vld [vmem:[%s555 + $0xd9] sm:$0xff]
        %v676 = vld [vmem:[%s555 + $0xe1] sm:$0xff]
        %v677 = vld [vmem:[%s555 + $0xf1] sm:$0xff]
        %v678 = vld [vmem:[%s555 + $0xf9] sm:$0xff]
        %v679 = vld [vmem:[%s555 + $0x109] sm:$0xff]
        %v680 = vld [vmem:[%s555 + $0x111] sm:$0xff]
        %v681 = vld [vmem:[%s555 + $0x121] sm:$0xff]
        %v682 = vld [vmem:[%s555 + $0x129] sm:$0xff]
        %v683 = vld [vmem:[%s555 + $0x139] sm:$0xff]
        %v684 = vld [vmem:[%s555 + $0x141] sm:$0xff]
        %v685 = vld [vmem:[%s555 + $0x151] sm:$0xff]
        %v686 = vld [vmem:[%s555 + $0x159] sm:$0xff]
        %v687 = vld [vmem:[%s555 + $0x169] sm:$0xff]
        %v688 = vld [vmem:[%s555 + $0x171] sm:$0xff]
        %v689 = vld [vmem:[%s1 + $0x4] sm:$0x1]
        %v690 = vlaneseq
        %v691 = vshrl.u32 %v690, 7
        %v692 = vsub.s32 0, %v691
        %v693 = vrot.slane %v689, %v692
        %v694 = vmul.f32 %v657, %v693
        %v695 = vmul.f32 %v658, %v693
        %v696 = vmul.f32 %v659, %v693
        %v697 = vmul.f32 %v660, %v693
        %v698 = vmul.f32 %v661, %v693
        %v699 = vmul.f32 %v662, %v693
        %v700 = vmul.f32 %v663, %v693
        %v701 = vmul.f32 %v664, %v693
        %v702 = vmul.f32 %v665, %v693
        %v703 = vmul.f32 %v666, %v693
        %v704 = vmul.f32 %v667, %v693
        %v705 = vmul.f32 %v668, %v693
        %v706 = vmul.f32 %v669, %v693
        %v707 = vmul.f32 %v670, %v693
        %v708 = vmul.f32 %v671, %v693
        %v709 = vmul.f32 %v672, %v693
        %v710 = vmul.f32 %v673, %v693
        %v711 = vmul.f32 %v674, %v693
        %v712 = vmul.f32 %v675, %v693
        %v713 = vmul.f32 %v676, %v693
        %v714 = vmul.f32 %v677, %v693
        %v715 = vmul.f32 %v678, %v693
        %v716 = vmul.f32 %v679, %v693
        %v717 = vmul.f32 %v680, %v693
        %v718 = vmul.f32 %v681, %v693
        %v719 = vmul.f32 %v682, %v693
        %v720 = vmul.f32 %v683, %v693
        %v721 = vmul.f32 %v684, %v693
        %v722 = vmul.f32 %v685, %v693
        %v723 = vmul.f32 %v686, %v693
        %v724 = vmul.f32 %v687, %v693
        %v725 = vmul.f32 %v688, %v693
        %v726 = vadd.f32 %v625, %v694
        %v727 = vadd.f32 %v626, %v695
        %v728 = vadd.f32 %v627, %v696
        %v729 = vadd.f32 %v628, %v697
        %v730 = vadd.f32 %v629, %v698
        %v731 = vadd.f32 %v630, %v699
        %v732 = vadd.f32 %v631, %v700
        %v733 = vadd.f32 %v632, %v701
        %v734 = vadd.f32 %v633, %v702
        %v735 = vadd.f32 %v634, %v703
        %v736 = vadd.f32 %v635, %v704
        %v737 = vadd.f32 %v636, %v705
        %v738 = vadd.f32 %v637, %v706
        %v739 = vadd.f32 %v638, %v707
        %v740 = vadd.f32 %v639, %v708
        %v741 = vadd.f32 %v640, %v709
        %v742 = vadd.f32 %v641, %v710
        %v743 = vadd.f32 %v642, %v711
        %v744 = vadd.f32 %v643, %v712
        %v745 = vadd.f32 %v644, %v713
        %v746 = vadd.f32 %v645, %v714
        %v747 = vadd.f32 %v646, %v715
        %v748 = vadd.f32 %v647, %v716
        %v749 = vadd.f32 %v648, %v717
        %v750 = vadd.f32 %v649, %v718
        %v751 = vadd.f32 %v650, %v719
        %v752 = vadd.f32 %v651, %v720
        %v753 = vadd.f32 %v652, %v721
        %v754 = vadd.f32 %v653, %v722
        %v755 = vadd.f32 %v654, %v723
        %v756 = vadd.f32 %v655, %v724
        %v757 = vadd.f32 %v656, %v725
        %v758 = vld [vmem:[%s555 + $0x2] sm:$0xff]
        %v759 = vld [vmem:[%s555 + $0xa] sm:$0xff]
        %v760 = vld [vmem:[%s555 + $0x1a] sm:$0xff]
        %v761 = vld [vmem:[%s555 + $0x22] sm:$0xff]
        %v762 = vld [vmem:[%s555 + $0x32] sm:$0xff]
        %v763 = vld [vmem:[%s555 + $0x3a] sm:$0xff]
        %v764 = vld [vmem:[%s555 + $0x4a] sm:$0xff]
        %v765 = vld [vmem:[%s555 + $0x52] sm:$0xff]
        %v766 = vld [vmem:[%s555 + $0x62] sm:$0xff]
        %v767 = vld [vmem:[%s555 + $0x6a] sm:$0xff]
        %v768 = vld [vmem:[%s555 + $0x7a] sm:$0xff]
        %v769 = vld [vmem:[%s555 + $0x82] sm:$0xff]
        %v770 = vld [vmem:[%s555 + $0x92] sm:$0xff]
        %v771 = vld [vmem:[%s555 + $0x9a] sm:$0xff]
        %v772 = vld [vmem:[%s555 + $0xaa] sm:$0xff]
        %v773 = vld [vmem:[%s555 + $0xb2] sm:$0xff]
        %v774 = vld [vmem:[%s555 + $0xc2] sm:$0xff]
        %v775 = vld [vmem:[%s555 + $0xca] sm:$0xff]
        %v776 = vld [vmem:[%s555 + $0xda] sm:$0xff]
        %v777 = vld [vmem:[%s555 + $0xe2] sm:$0xff]
        %v778 = vld [vmem:[%s555 + $0xf2] sm:$0xff]
        %v779 = vld [vmem:[%s555 + $0xfa] sm:$0xff]
        %v780 = vld [vmem:[%s555 + $0x10a] sm:$0xff]
        %v781 = vld [vmem:[%s555 + $0x112] sm:$0xff]
        %v782 = vld [vmem:[%s555 + $0x122] sm:$0xff]
        %v783 = vld [vmem:[%s555 + $0x12a] sm:$0xff]
        %v784 = vld [vmem:[%s555 + $0x13a] sm:$0xff]
        %v785 = vld [vmem:[%s555 + $0x142] sm:$0xff]
        %v786 = vld [vmem:[%s555 + $0x152] sm:$0xff]
        %v787 = vld [vmem:[%s555 + $0x15a] sm:$0xff]
        %v788 = vld [vmem:[%s555 + $0x16a] sm:$0xff]
        %v789 = vld [vmem:[%s555 + $0x172] sm:$0xff]
        %v790 = vld [vmem:[%s1 + $0x5] sm:$0x1]
        %v791 = vlaneseq
        %v792 = vshrl.u32 %v791, 7
        %v793 = vsub.s32 0, %v792
        %v794 = vrot.slane %v790, %v793
        %v795 = vmul.f32 %v758, %v794
        %v796 = vmul.f32 %v759, %v794
        %v797 = vmul.f32 %v760, %v794
        %v798 = vmul.f32 %v761, %v794
        %v799 = vmul.f32 %v762, %v794
        %v800 = vmul.f32 %v763, %v794
        %v801 = vmul.f32 %v764, %v794
        %v802 = vmul.f32 %v765, %v794
        %v803 = vmul.f32 %v766, %v794
        %v804 = vmul.f32 %v767, %v794
        %v805 = vmul.f32 %v768, %v794
        %v806 = vmul.f32 %v769, %v794
        %v807 = vmul.f32 %v770, %v794
        %v808 = vmul.f32 %v771, %v794
        %v809 = vmul.f32 %v772, %v794
        %v810 = vmul.f32 %v773, %v794
        %v811 = vmul.f32 %v774, %v794
        %v812 = vmul.f32 %v775, %v794
        %v813 = vmul.f32 %v776, %v794
        %v814 = vmul.f32 %v777, %v794
        %v815 = vmul.f32 %v778, %v794
        %v816 = vmul.f32 %v779, %v794
        %v817 = vmul.f32 %v780, %v794
        %v818 = vmul.f32 %v781, %v794
        %v819 = vmul.f32 %v782, %v794
        %v820 = vmul.f32 %v783, %v794
        %v821 = vmul.f32 %v784, %v794
        %v822 = vmul.f32 %v785, %v794
        %v823 = vmul.f32 %v786, %v794
        %v824 = vmul.f32 %v787, %v794
        %v825 = vmul.f32 %v788, %v794
        %v826 = vmul.f32 %v789, %v794
        %v827 = vadd.f32 %v726, %v795
        %v828 = vadd.f32 %v727, %v796
        %v829 = vadd.f32 %v728, %v797
        %v830 = vadd.f32 %v729, %v798
        %v831 = vadd.f32 %v730, %v799
        %v832 = vadd.f32 %v731, %v800
        %v833 = vadd.f32 %v732, %v801
        %v834 = vadd.f32 %v733, %v802
        %v835 = vadd.f32 %v734, %v803
        %v836 = vadd.f32 %v735, %v804
        %v837 = vadd.f32 %v736, %v805
        %v838 = vadd.f32 %v737, %v806
        %v839 = vadd.f32 %v738, %v807
        %v840 = vadd.f32 %v739, %v808
        %v841 = vadd.f32 %v740, %v809
        %v842 = vadd.f32 %v741, %v810
        %v843 = vadd.f32 %v742, %v811
        %v844 = vadd.f32 %v743, %v812
        %v845 = vadd.f32 %v744, %v813
        %v846 = vadd.f32 %v745, %v814
        %v847 = vadd.f32 %v746, %v815
        %v848 = vadd.f32 %v747, %v816
        %v849 = vadd.f32 %v748, %v817
        %v850 = vadd.f32 %v749, %v818
        %v851 = vadd.f32 %v750, %v819
        %v852 = vadd.f32 %v751, %v820
        %v853 = vadd.f32 %v752, %v821
        %v854 = vadd.f32 %v753, %v822
        %v855 = vadd.f32 %v754, %v823
        %v856 = vadd.f32 %v755, %v824
        %v857 = vadd.f32 %v756, %v825
        %v858 = vadd.f32 %v757, %v826
        %s859 = scalar_lea.vmem %s250, 48
        %v860 = vld [vmem:[%s859] sm:$0xff]
        %v861 = vld [vmem:[%s859 + $0x8] sm:$0xff]
        %v862 = vld [vmem:[%s859 + $0x18] sm:$0xff]
        %v863 = vld [vmem:[%s859 + $0x20] sm:$0xff]
        %v864 = vld [vmem:[%s859 + $0x30] sm:$0xff]
        %v865 = vld [vmem:[%s859 + $0x38] sm:$0xff]
        %v866 = vld [vmem:[%s859 + $0x48] sm:$0xff]
        %v867 = vld [vmem:[%s859 + $0x50] sm:$0xff]
        %v868 = vld [vmem:[%s859 + $0x60] sm:$0xff]
        %v869 = vld [vmem:[%s859 + $0x68] sm:$0xff]
        %v870 = vld [vmem:[%s859 + $0x78] sm:$0xff]
        %v871 = vld [vmem:[%s859 + $0x80] sm:$0xff]
        %v872 = vld [vmem:[%s859 + $0x90] sm:$0xff]
        %v873 = vld [vmem:[%s859 + $0x98] sm:$0xff]
        %v874 = vld [vmem:[%s859 + $0xa8] sm:$0xff]
        %v875 = vld [vmem:[%s859 + $0xb0] sm:$0xff]
        %v876 = vld [vmem:[%s859 + $0xc0] sm:$0xff]
        %v877 = vld [vmem:[%s859 + $0xc8] sm:$0xff]
        %v878 = vld [vmem:[%s859 + $0xd8] sm:$0xff]
        %v879 = vld [vmem:[%s859 + $0xe0] sm:$0xff]
        %v880 = vld [vmem:[%s859 + $0xf0] sm:$0xff]
        %v881 = vld [vmem:[%s859 + $0xf8] sm:$0xff]
        %v882 = vld [vmem:[%s859 + $0x108] sm:$0xff]
        %v883 = vld [vmem:[%s859 + $0x110] sm:$0xff]
        %v884 = vld [vmem:[%s859 + $0x120] sm:$0xff]
        %v885 = vld [vmem:[%s859 + $0x128] sm:$0xff]
        %v886 = vld [vmem:[%s859 + $0x138] sm:$0xff]
        %v887 = vld [vmem:[%s859 + $0x140] sm:$0xff]
        %v888 = vld [vmem:[%s859 + $0x150] sm:$0xff]
        %v889 = vld [vmem:[%s859 + $0x158] sm:$0xff]
        %v890 = vld [vmem:[%s859 + $0x168] sm:$0xff]
        %v891 = vld [vmem:[%s859 + $0x170] sm:$0xff]
        %v892 = vld [vmem:[%s1 + $0x6] sm:$0x1]
        %v893 = vlaneseq
        %v894 = vshrl.u32 %v893, 7
        %v895 = vsub.s32 0, %v894
        %v896 = vrot.slane %v892, %v895
        %v897 = vmul.f32 %v860, %v896
        %v898 = vmul.f32 %v861, %v896
        %v899 = vmul.f32 %v862, %v896
        %v900 = vmul.f32 %v863, %v896
        %v901 = vmul.f32 %v864, %v896
        %v902 = vmul.f32 %v865, %v896
        %v903 = vmul.f32 %v866, %v896
        %v904 = vmul.f32 %v867, %v896
        %v905 = vmul.f32 %v868, %v896
        %v906 = vmul.f32 %v869, %v896
        %v907 = vmul.f32 %v870, %v896
        %v908 = vmul.f32 %v871, %v896
        %v909 = vmul.f32 %v872, %v896
        %v910 = vmul.f32 %v873, %v896
        %v911 = vmul.f32 %v874, %v896
        %v912 = vmul.f32 %v875, %v896
        %v913 = vmul.f32 %v876, %v896
        %v914 = vmul.f32 %v877, %v896
        %v915 = vmul.f32 %v878, %v896
        %v916 = vmul.f32 %v879, %v896
        %v917 = vmul.f32 %v880, %v896
        %v918 = vmul.f32 %v881, %v896
        %v919 = vmul.f32 %v882, %v896
        %v920 = vmul.f32 %v883, %v896
        %v921 = vmul.f32 %v884, %v896
        %v922 = vmul.f32 %v885, %v896
        %v923 = vmul.f32 %v886, %v896
        %v924 = vmul.f32 %v887, %v896
        %v925 = vmul.f32 %v888, %v896
        %v926 = vmul.f32 %v889, %v896
        %v927 = vmul.f32 %v890, %v896
        %v928 = vmul.f32 %v891, %v896
        %v929 = vadd.f32 %v827, %v897
        %v930 = vadd.f32 %v828, %v898
        %v931 = vadd.f32 %v829, %v899
        %v932 = vadd.f32 %v830, %v900
        %v933 = vadd.f32 %v831, %v901
        %v934 = vadd.f32 %v832, %v902
        %v935 = vadd.f32 %v833, %v903
        %v936 = vadd.f32 %v834, %v904
        %v937 = vadd.f32 %v835, %v905
        %v938 = vadd.f32 %v836, %v906
        %v939 = vadd.f32 %v837, %v907
        %v940 = vadd.f32 %v838, %v908
        %v941 = vadd.f32 %v839, %v909
        %v942 = vadd.f32 %v840, %v910
        %v943 = vadd.f32 %v841, %v911
        %v944 = vadd.f32 %v842, %v912
        %v945 = vadd.f32 %v843, %v913
        %v946 = vadd.f32 %v844, %v914
        %v947 = vadd.f32 %v845, %v915
        %v948 = vadd.f32 %v846, %v916
        %v949 = vadd.f32 %v847, %v917
        %v950 = vadd.f32 %v848, %v918
        %v951 = vadd.f32 %v849, %v919
        %v952 = vadd.f32 %v850, %v920
        %v953 = vadd.f32 %v851, %v921
        %v954 = vadd.f32 %v852, %v922
        %v955 = vadd.f32 %v853, %v923
        %v956 = vadd.f32 %v854, %v924
        %v957 = vadd.f32 %v855, %v925
        %v958 = vadd.f32 %v856, %v926
        %v959 = vadd.f32 %v857, %v927
        %v960 = vadd.f32 %v858, %v928
        %v961 = vld [vmem:[%s859 + $0x1] sm:$0xff]
        %v962 = vld [vmem:[%s859 + $0x9] sm:$0xff]
        %v963 = vld [vmem:[%s859 + $0x19] sm:$0xff]
        %v964 = vld [vmem:[%s859 + $0x21] sm:$0xff]
        %v965 = vld [vmem:[%s859 + $0x31] sm:$0xff]
        %v966 = vld [vmem:[%s859 + $0x39] sm:$0xff]
        %v967 = vld [vmem:[%s859 + $0x49] sm:$0xff]
        %v968 = vld [vmem:[%s859 + $0x51] sm:$0xff]
        %v969 = vld [vmem:[%s859 + $0x61] sm:$0xff]
        %v970 = vld [vmem:[%s859 + $0x69] sm:$0xff]
        %v971 = vld [vmem:[%s859 + $0x79] sm:$0xff]
        %v972 = vld [vmem:[%s859 + $0x81] sm:$0xff]
        %v973 = vld [vmem:[%s859 + $0x91] sm:$0xff]
        %v974 = vld [vmem:[%s859 + $0x99] sm:$0xff]
        %v975 = vld [vmem:[%s859 + $0xa9] sm:$0xff]
        %v976 = vld [vmem:[%s859 + $0xb1] sm:$0xff]
        %v977 = vld [vmem:[%s859 + $0xc1] sm:$0xff]
        %v978 = vld [vmem:[%s859 + $0xc9] sm:$0xff]
        %v979 = vld [vmem:[%s859 + $0xd9] sm:$0xff]
        %v980 = vld [vmem:[%s859 + $0xe1] sm:$0xff]
        %v981 = vld [vmem:[%s859 + $0xf1] sm:$0xff]
        %v982 = vld [vmem:[%s859 + $0xf9] sm:$0xff]
        %v983 = vld [vmem:[%s859 + $0x109] sm:$0xff]
        %v984 = vld [vmem:[%s859 + $0x111] sm:$0xff]
        %v985 = vld [vmem:[%s859 + $0x121] sm:$0xff]
        %v986 = vld [vmem:[%s859 + $0x129] sm:$0xff]
        %v987 = vld [vmem:[%s859 + $0x139] sm:$0xff]
        %v988 = vld [vmem:[%s859 + $0x141] sm:$0xff]
        %v989 = vld [vmem:[%s859 + $0x151] sm:$0xff]
        %v990 = vld [vmem:[%s859 + $0x159] sm:$0xff]
        %v991 = vld [vmem:[%s859 + $0x169] sm:$0xff]
        %v992 = vld [vmem:[%s859 + $0x171] sm:$0xff]
        %v993 = vld [vmem:[%s1 + $0x7] sm:$0x1]
        %v994 = vlaneseq
        %v995 = vshrl.u32 %v994, 7
        %v996 = vsub.s32 0, %v995
        %v997 = vrot.slane %v993, %v996
        %v998 = vmul.f32 %v961, %v997
        %v999 = vmul.f32 %v962, %v997
        %v1000 = vmul.f32 %v963, %v997
        %v1001 = vmul.f32 %v964, %v997
        %v1002 = vmul.f32 %v965, %v997
        %v1003 = vmul.f32 %v966, %v997
        %v1004 = vmul.f32 %v967, %v997
        %v1005 = vmul.f32 %v968, %v997
        %v1006 = vmul.f32 %v969, %v997
        %v1007 = vmul.f32 %v970, %v997
        %v1008 = vmul.f32 %v971, %v997
        %v1009 = vmul.f32 %v972, %v997
        %v1010 = vmul.f32 %v973, %v997
        %v1011 = vmul.f32 %v974, %v997
        %v1012 = vmul.f32 %v975, %v997
        %v1013 = vmul.f32 %v976, %v997
        %v1014 = vmul.f32 %v977, %v997
        %v1015 = vmul.f32 %v978, %v997
        %v1016 = vmul.f32 %v979, %v997
        %v1017 = vmul.f32 %v980, %v997
        %v1018 = vmul.f32 %v981, %v997
        %v1019 = vmul.f32 %v982, %v997
        %v1020 = vmul.f32 %v983, %v997
        %v1021 = vmul.f32 %v984, %v997
        %v1022 = vmul.f32 %v985, %v997
        %v1023 = vmul.f32 %v986, %v997
        %v1024 = vmul.f32 %v987, %v997
        %v1025 = vmul.f32 %v988, %v997
        %v1026 = vmul.f32 %v989, %v997
        %v1027 = vmul.f32 %v990, %v997
        %v1028 = vmul.f32 %v991, %v997
        %v1029 = vmul.f32 %v992, %v997
        %v1030 = vadd.f32 %v929, %v998
        %v1031 = vadd.f32 %v930, %v999
        %v1032 = vadd.f32 %v931, %v1000
        %v1033 = vadd.f32 %v932, %v1001
        %v1034 = vadd.f32 %v933, %v1002
        %v1035 = vadd.f32 %v934, %v1003
        %v1036 = vadd.f32 %v935, %v1004
        %v1037 = vadd.f32 %v936, %v1005
        %v1038 = vadd.f32 %v937, %v1006
        %v1039 = vadd.f32 %v938, %v1007
        %v1040 = vadd.f32 %v939, %v1008
        %v1041 = vadd.f32 %v940, %v1009
        %v1042 = vadd.f32 %v941, %v1010
        %v1043 = vadd.f32 %v942, %v1011
        %v1044 = vadd.f32 %v943, %v1012
        %v1045 = vadd.f32 %v944, %v1013
        %v1046 = vadd.f32 %v945, %v1014
        %v1047 = vadd.f32 %v946, %v1015
        %v1048 = vadd.f32 %v947, %v1016
        %v1049 = vadd.f32 %v948, %v1017
        %v1050 = vadd.f32 %v949, %v1018
        %v1051 = vadd.f32 %v950, %v1019
        %v1052 = vadd.f32 %v951, %v1020
        %v1053 = vadd.f32 %v952, %v1021
        %v1054 = vadd.f32 %v953, %v1022
        %v1055 = vadd.f32 %v954, %v1023
        %v1056 = vadd.f32 %v955, %v1024
        %v1057 = vadd.f32 %v956, %v1025
        %v1058 = vadd.f32 %v957, %v1026
        %v1059 = vadd.f32 %v958, %v1027
        %v1060 = vadd.f32 %v959, %v1028
        %v1061 = vadd.f32 %v960, %v1029
        %v1062 = vld [vmem:[%s859 + $0x2] sm:$0xff]
        %v1063 = vld [vmem:[%s859 + $0xa] sm:$0xff]
        %v1064 = vld [vmem:[%s859 + $0x1a] sm:$0xff]
        %v1065 = vld [vmem:[%s859 + $0x22] sm:$0xff]
        %v1066 = vld [vmem:[%s859 + $0x32] sm:$0xff]
        %v1067 = vld [vmem:[%s859 + $0x3a] sm:$0xff]
        %v1068 = vld [vmem:[%s859 + $0x4a] sm:$0xff]
        %v1069 = vld [vmem:[%s859 + $0x52] sm:$0xff]
        %v1070 = vld [vmem:[%s859 + $0x62] sm:$0xff]
        %v1071 = vld [vmem:[%s859 + $0x6a] sm:$0xff]
        %v1072 = vld [vmem:[%s859 + $0x7a] sm:$0xff]
        %v1073 = vld [vmem:[%s859 + $0x82] sm:$0xff]
        %v1074 = vld [vmem:[%s859 + $0x92] sm:$0xff]
        %v1075 = vld [vmem:[%s859 + $0x9a] sm:$0xff]
        %v1076 = vld [vmem:[%s859 + $0xaa] sm:$0xff]
        %v1077 = vld [vmem:[%s859 + $0xb2] sm:$0xff]
        %v1078 = vld [vmem:[%s859 + $0xc2] sm:$0xff]
        %v1079 = vld [vmem:[%s859 + $0xca] sm:$0xff]
        %v1080 = vld [vmem:[%s859 + $0xda] sm:$0xff]
        %v1081 = vld [vmem:[%s859 + $0xe2] sm:$0xff]
        %v1082 = vld [vmem:[%s859 + $0xf2] sm:$0xff]
        %v1083 = vld [vmem:[%s859 + $0xfa] sm:$0xff]
        %v1084 = vld [vmem:[%s859 + $0x10a] sm:$0xff]
        %v1085 = vld [vmem:[%s859 + $0x112] sm:$0xff]
        %v1086 = vld [vmem:[%s859 + $0x122] sm:$0xff]
        %v1087 = vld [vmem:[%s859 + $0x12a] sm:$0xff]
        %v1088 = vld [vmem:[%s859 + $0x13a] sm:$0xff]
        %v1089 = vld [vmem:[%s859 + $0x142] sm:$0xff]
        %v1090 = vld [vmem:[%s859 + $0x152] sm:$0xff]
        %v1091 = vld [vmem:[%s859 + $0x15a] sm:$0xff]
        %v1092 = vld [vmem:[%s859 + $0x16a] sm:$0xff]
        %v1093 = vld [vmem:[%s859 + $0x172] sm:$0xff]
        %v1094 = vld [vmem:[%s1 + $0x8] sm:$0x1]
        %v1095 = vlaneseq
        %v1096 = vshrl.u32 %v1095, 7
        %v1097 = vsub.s32 0, %v1096
        %v1098 = vrot.slane %v1094, %v1097
        %v1099 = vmul.f32 %v1062, %v1098
        %v1100 = vmul.f32 %v1063, %v1098
        %v1101 = vmul.f32 %v1064, %v1098
        %v1102 = vmul.f32 %v1065, %v1098
        %v1103 = vmul.f32 %v1066, %v1098
        %v1104 = vmul.f32 %v1067, %v1098
        %v1105 = vmul.f32 %v1068, %v1098
        %v1106 = vmul.f32 %v1069, %v1098
        %v1107 = vmul.f32 %v1070, %v1098
        %v1108 = vmul.f32 %v1071, %v1098
        %v1109 = vmul.f32 %v1072, %v1098
        %v1110 = vmul.f32 %v1073, %v1098
        %v1111 = vmul.f32 %v1074, %v1098
        %v1112 = vmul.f32 %v1075, %v1098
        %v1113 = vmul.f32 %v1076, %v1098
        %v1114 = vmul.f32 %v1077, %v1098
        %v1115 = vmul.f32 %v1078, %v1098
        %v1116 = vmul.f32 %v1079, %v1098
        %v1117 = vmul.f32 %v1080, %v1098
        %v1118 = vmul.f32 %v1081, %v1098
        %v1119 = vmul.f32 %v1082, %v1098
        %v1120 = vmul.f32 %v1083, %v1098
        %v1121 = vmul.f32 %v1084, %v1098
        %v1122 = vmul.f32 %v1085, %v1098
        %v1123 = vmul.f32 %v1086, %v1098
        %v1124 = vmul.f32 %v1087, %v1098
        %v1125 = vmul.f32 %v1088, %v1098
        %v1126 = vmul.f32 %v1089, %v1098
        %v1127 = vmul.f32 %v1090, %v1098
        %v1128 = vmul.f32 %v1091, %v1098
        %v1129 = vmul.f32 %v1092, %v1098
        %v1130 = vmul.f32 %v1093, %v1098
        %v1131 = vadd.f32 %v1030, %v1099
        %v1132 = vadd.f32 %v1031, %v1100
        %v1133 = vadd.f32 %v1032, %v1101
        %v1134 = vadd.f32 %v1033, %v1102
        %v1135 = vadd.f32 %v1034, %v1103
        %v1136 = vadd.f32 %v1035, %v1104
        %v1137 = vadd.f32 %v1036, %v1105
        %v1138 = vadd.f32 %v1037, %v1106
        %v1139 = vadd.f32 %v1038, %v1107
        %v1140 = vadd.f32 %v1039, %v1108
        %v1141 = vadd.f32 %v1040, %v1109
        %v1142 = vadd.f32 %v1041, %v1110
        %v1143 = vadd.f32 %v1042, %v1111
        %v1144 = vadd.f32 %v1043, %v1112
        %v1145 = vadd.f32 %v1044, %v1113
        %v1146 = vadd.f32 %v1045, %v1114
        %v1147 = vadd.f32 %v1046, %v1115
        %v1148 = vadd.f32 %v1047, %v1116
        %v1149 = vadd.f32 %v1048, %v1117
        %v1150 = vadd.f32 %v1049, %v1118
        %v1151 = vadd.f32 %v1050, %v1119
        %v1152 = vadd.f32 %v1051, %v1120
        %v1153 = vadd.f32 %v1052, %v1121
        %v1154 = vadd.f32 %v1053, %v1122
        %v1155 = vadd.f32 %v1054, %v1123
        %v1156 = vadd.f32 %v1055, %v1124
        %v1157 = vadd.f32 %v1056, %v1125
        %v1158 = vadd.f32 %v1057, %v1126
        %v1159 = vadd.f32 %v1058, %v1127
        %v1160 = vadd.f32 %v1059, %v1128
        %v1161 = vadd.f32 %v1060, %v1129
        %v1162 = vadd.f32 %v1061, %v1130
        %v1163 = vld [vmem:[%s2] sm:$0x1]
        %v1165 = vlaneseq
        %v1166 = vshrl.u32 %v1165, 7
        %v1167 = vsub.s32 0, %v1166
        %v1168 = vrot.slane %v1163, %v1167
        %v1170 = vadd.f32 %v1131, %v1168
        %v1171 = vadd.f32 %v1132, %v1168
        %v1172 = vadd.f32 %v1133, %v1168
        %v1173 = vadd.f32 %v1134, %v1168
        %v1174 = vadd.f32 %v1135, %v1168
        %v1175 = vadd.f32 %v1136, %v1168
        %v1176 = vadd.f32 %v1137, %v1168
        %v1177 = vadd.f32 %v1138, %v1168
        %v1178 = vadd.f32 %v1139, %v1168
        %v1179 = vadd.f32 %v1140, %v1168
        %v1180 = vadd.f32 %v1141, %v1168
        %v1181 = vadd.f32 %v1142, %v1168
        %v1182 = vadd.f32 %v1143, %v1168
        %v1183 = vadd.f32 %v1144, %v1168
        %v1184 = vadd.f32 %v1145, %v1168
        %v1185 = vadd.f32 %v1146, %v1168
        %v1186 = vadd.f32 %v1147, %v1168
        %v1187 = vadd.f32 %v1148, %v1168
        %v1188 = vadd.f32 %v1149, %v1168
        %v1189 = vadd.f32 %v1150, %v1168
        %v1190 = vadd.f32 %v1151, %v1168
        %v1191 = vadd.f32 %v1152, %v1168
        %v1192 = vadd.f32 %v1153, %v1168
        %v1193 = vadd.f32 %v1154, %v1168
        %v1194 = vadd.f32 %v1155, %v1168
        %v1195 = vadd.f32 %v1156, %v1168
        %v1196 = vadd.f32 %v1157, %v1168
        %v1197 = vadd.f32 %v1158, %v1168
        %v1198 = vadd.f32 %v1159, %v1168
        %v1199 = vadd.f32 %v1160, %v1168
        %v1200 = vadd.f32 %v1161, %v1168
        %v1201 = vadd.f32 %v1162, %v1168
        %v1202 = vld [vmem:[%s3] sm:$0xff]
        %v1203 = vld [vmem:[%s3 + $0x8] sm:$0xff]
        %v1204 = vld [vmem:[%s3 + $0x10] sm:$0xff]
        %v1205 = vld [vmem:[%s3 + $0x18] sm:$0xff]
        %v1206 = vld [vmem:[%s3 + $0x20] sm:$0xff]
        %v1207 = vld [vmem:[%s3 + $0x28] sm:$0xff]
        %v1208 = vld [vmem:[%s3 + $0x30] sm:$0xff]
        %v1209 = vld [vmem:[%s3 + $0x38] sm:$0xff]
        %v1210 = vld [vmem:[%s3 + $0x40] sm:$0xff]
        %v1211 = vld [vmem:[%s3 + $0x48] sm:$0xff]
        %v1212 = vld [vmem:[%s3 + $0x50] sm:$0xff]
        %v1213 = vld [vmem:[%s3 + $0x58] sm:$0xff]
        %v1214 = vld [vmem:[%s3 + $0x60] sm:$0xff]
        %v1215 = vld [vmem:[%s3 + $0x68] sm:$0xff]
        %v1216 = vld [vmem:[%s3 + $0x70] sm:$0xff]
        %v1217 = vld [vmem:[%s3 + $0x78] sm:$0xff]
        %v1218 = vld [vmem:[%s4] sm:$0x1]
        %v1220 = vlaneseq
        %v1221 = vshrl.u32 %v1220, 7
        %v1222 = vsub.s32 0, %v1221
        %v1223 = vrot.slane %v1218, %v1222
        %1225 = vmatprep.subr.mxu0 0.0
        %1226 = vmatpush1.msra.mxu0 %v1217
        %1227 = vmatprep.subr.mxu0 0.0
        %1228 = vmatpush1.msra.mxu0 %v1216
        %1229 = vmatprep.subr.mxu0 0.0
        %1230 = vmatpush1.msra.mxu0 %v1215
        %1231 = vmatprep.subr.mxu0 0.0
        %1232 = vmatpush1.msra.mxu0 %v1214
        %1233 = vmatprep.subr.mxu0 0.0
        %1234 = vmatpush1.msra.mxu0 %v1213
        %1235 = vmatprep.subr.mxu0 0.0
        %1236 = vmatpush1.msra.mxu0 %v1212
        %1237 = vmatprep.subr.mxu0 0.0
        %1238 = vmatpush1.msra.mxu0 %v1211
        %1239 = vmatprep.subr.mxu0 0.0
        %1240 = vmatpush1.msra.mxu0 %v1210
        %1241 = vmatprep.subr.mxu0 0.0
        %1242 = vmatpush1.msra.mxu0 %v1209
        %1243 = vmatprep.subr.mxu0 0.0
        %1244 = vmatpush1.msra.mxu0 %v1208
        %1245 = vmatprep.subr.mxu0 0.0
        %1246 = vmatpush1.msra.mxu0 %v1207
        %1247 = vmatprep.subr.mxu0 0.0
        %1248 = vmatpush1.msra.mxu0 %v1206
        %1249 = vmatprep.subr.mxu0 0.0
        %1250 = vmatpush1.msra.mxu0 %v1205
        %1251 = vmatprep.subr.mxu0 0.0
        %1252 = vmatpush1.msra.mxu0 %v1204
        %1253 = vmatprep.subr.mxu0 0.0
        %1254 = vmatpush1.msra.mxu0 %v1203
        %1255 = vmatprep.subr.mxu0 0.0
        %1256 = vmatpush1.msra.mxu0 %v1202
        %1257 = vmatprep.subr.mxu0 0.0
        %1258 = vmatpush2.msra.mxu0 0.0
        %1259 = vmatprep.subr.mxu0 0.0
        %1260 = vmatpush2.msra.mxu0 0.0
        %1261 = vmatprep.subr.mxu0 0.0
        %1262 = vmatpush2.msra.mxu0 0.0
        %1263 = vmatprep.subr.mxu0 0.0
        %1264 = vmatpush2.msra.mxu0 0.0
        %1265 = vmatprep.subr.mxu0 0.0
        %1266 = vmatpush2.msra.mxu0 0.0
        %1267 = vmatprep.subr.mxu0 0.0
        %1268 = vmatpush2.msra.mxu0 0.0
        %1269 = vmatprep.subr.mxu0 0.0
        %1270 = vmatpush2.msra.mxu0 0.0
        %1271 = vmatprep.subr.mxu0 0.0
        %1272 = vmatpush2.msra.mxu0 0.0
        %1273 = vmatprep.subr.mxu0 0.0
        %1274 = vmatpush2.msra.mxu0 0.0
        %1275 = vmatprep.subr.mxu0 0.0
        %1276 = vmatpush2.msra.mxu0 0.0
        %1277 = vmatprep.subr.mxu0 0.0
        %1278 = vmatpush2.msra.mxu0 0.0
        %1279 = vmatprep.subr.mxu0 0.0
        %1280 = vmatpush2.msra.mxu0 0.0
        %1281 = vmatprep.subr.mxu0 0.0
        %1282 = vmatpush2.msra.mxu0 0.0
        %1283 = vmatprep.subr.mxu0 0.0
        %1284 = vmatpush2.msra.mxu0 0.0
        %1285 = vmatprep.subr.mxu0 0.0
        %1286 = vmatpush2.msra.mxu0 0.0
        %1287 = vmatprep.subr.mxu0 0.0
        %1288 = vmatpush2.msra.mxu0 0.0
        %1289 = vmatprep.mubr.f32.mxu0 0.0
        %1290 = vmatmul.mubr.f32.gmra.mxu0 %v1170
        %v1291 = vpop.f32.mrf.mxu0
        %v1292 = vadd.f32 %v1223, %v1291
        %v1293 = vpop.f32.mrf.mxu0
        %1294 = vmatprep.mubr.f32.mxu0 0.0
        %1295 = vmatmul.mubr.f32.gmra.mxu0 %v1171
        %v1296 = vpop.f32.mrf.mxu0
        %v1297 = vadd.f32 %v1223, %v1296
        %v1298 = vpop.f32.mrf.mxu0
        %1299 = vmatprep.mubr.f32.mxu0 0.0
        %1300 = vmatmul.mubr.f32.gmra.mxu0 %v1172
        %v1301 = vpop.f32.mrf.mxu0
        %v1302 = vadd.f32 %v1223, %v1301
        %v1303 = vpop.f32.mrf.mxu0
        %1304 = vmatprep.mubr.f32.mxu0 0.0
        %1305 = vmatmul.mubr.f32.gmra.mxu0 %v1173
        %v1306 = vpop.f32.mrf.mxu0
        %v1307 = vadd.f32 %v1223, %v1306
        %v1308 = vpop.f32.mrf.mxu0
        %1309 = vmatprep.mubr.f32.mxu0 0.0
        %1310 = vmatmul.mubr.f32.gmra.mxu0 %v1174
        %v1311 = vpop.f32.mrf.mxu0
        %v1312 = vadd.f32 %v1223, %v1311
        %v1313 = vpop.f32.mrf.mxu0
        %1314 = vmatprep.mubr.f32.mxu0 0.0
        %1315 = vmatmul.mubr.f32.gmra.mxu0 %v1175
        %v1316 = vpop.f32.mrf.mxu0
        %v1317 = vadd.f32 %v1223, %v1316
        %v1318 = vpop.f32.mrf.mxu0
        %1319 = vmatprep.mubr.f32.mxu0 0.0
        %1320 = vmatmul.mubr.f32.gmra.mxu0 %v1176
        %v1321 = vpop.f32.mrf.mxu0
        %v1322 = vadd.f32 %v1223, %v1321
        %v1323 = vpop.f32.mrf.mxu0
        %1324 = vmatprep.mubr.f32.mxu0 0.0
        %1325 = vmatmul.mubr.f32.gmra.mxu0 %v1177
        %v1326 = vpop.f32.mrf.mxu0
        %v1327 = vadd.f32 %v1223, %v1326
        %v1328 = vpop.f32.mrf.mxu0
        %1329 = vmatprep.mubr.f32.mxu0 0.0
        %1330 = vmatmul.mubr.f32.gmra.mxu0 %v1178
        %v1331 = vpop.f32.mrf.mxu0
        %v1332 = vadd.f32 %v1223, %v1331
        %v1333 = vpop.f32.mrf.mxu0
        %1334 = vmatprep.mubr.f32.mxu0 0.0
        %1335 = vmatmul.mubr.f32.gmra.mxu0 %v1179
        %v1336 = vpop.f32.mrf.mxu0
        %v1337 = vadd.f32 %v1223, %v1336
        %v1338 = vpop.f32.mrf.mxu0
        %1339 = vmatprep.mubr.f32.mxu0 0.0
        %1340 = vmatmul.mubr.f32.gmra.mxu0 %v1180
        %v1341 = vpop.f32.mrf.mxu0
        %v1342 = vadd.f32 %v1223, %v1341
        %v1343 = vpop.f32.mrf.mxu0
        %1344 = vmatprep.mubr.f32.mxu0 0.0
        %1345 = vmatmul.mubr.f32.gmra.mxu0 %v1181
        %v1346 = vpop.f32.mrf.mxu0
        %v1347 = vadd.f32 %v1223, %v1346
        %v1348 = vpop.f32.mrf.mxu0
        %1349 = vmatprep.mubr.f32.mxu0 0.0
        %1350 = vmatmul.mubr.f32.gmra.mxu0 %v1182
        %v1351 = vpop.f32.mrf.mxu0
        %v1352 = vadd.f32 %v1223, %v1351
        %v1353 = vpop.f32.mrf.mxu0
        %1354 = vmatprep.mubr.f32.mxu0 0.0
        %1355 = vmatmul.mubr.f32.gmra.mxu0 %v1183
        %v1356 = vpop.f32.mrf.mxu0
        %v1357 = vadd.f32 %v1223, %v1356
        %v1358 = vpop.f32.mrf.mxu0
        %1359 = vmatprep.mubr.f32.mxu0 0.0
        %1360 = vmatmul.mubr.f32.gmra.mxu0 %v1184
        %v1361 = vpop.f32.mrf.mxu0
        %v1362 = vadd.f32 %v1223, %v1361
        %v1363 = vpop.f32.mrf.mxu0
        %1364 = vmatprep.mubr.f32.mxu0 0.0
        %1365 = vmatmul.mubr.f32.gmra.mxu0 %v1185
        %v1366 = vpop.f32.mrf.mxu0
        %v1367 = vadd.f32 %v1223, %v1366
        %v1368 = vpop.f32.mrf.mxu0
        %1369 = vmatprep.mubr.f32.mxu0 0.0
        %1370 = vmatmul.mubr.f32.gmra.mxu0 %v1186
        %v1371 = vpop.f32.mrf.mxu0
        %v1372 = vadd.f32 %v1223, %v1371
        %v1373 = vpop.f32.mrf.mxu0
        %1374 = vmatprep.mubr.f32.mxu0 0.0
        %1375 = vmatmul.mubr.f32.gmra.mxu0 %v1187
        %v1376 = vpop.f32.mrf.mxu0
        %v1377 = vadd.f32 %v1223, %v1376
        %v1378 = vpop.f32.mrf.mxu0
        %1379 = vmatprep.mubr.f32.mxu0 0.0
        %1380 = vmatmul.mubr.f32.gmra.mxu0 %v1188
        %v1381 = vpop.f32.mrf.mxu0
        %v1382 = vadd.f32 %v1223, %v1381
        %v1383 = vpop.f32.mrf.mxu0
        %1384 = vmatprep.mubr.f32.mxu0 0.0
        %1385 = vmatmul.mubr.f32.gmra.mxu0 %v1189
        %v1386 = vpop.f32.mrf.mxu0
        %v1387 = vadd.f32 %v1223, %v1386
        %v1388 = vpop.f32.mrf.mxu0
        %1389 = vmatprep.mubr.f32.mxu0 0.0
        %1390 = vmatmul.mubr.f32.gmra.mxu0 %v1190
        %v1391 = vpop.f32.mrf.mxu0
        %v1392 = vadd.f32 %v1223, %v1391
        %v1393 = vpop.f32.mrf.mxu0
        %1394 = vmatprep.mubr.f32.mxu0 0.0
        %1395 = vmatmul.mubr.f32.gmra.mxu0 %v1191
        %v1396 = vpop.f32.mrf.mxu0
        %v1397 = vadd.f32 %v1223, %v1396
        %v1398 = vpop.f32.mrf.mxu0
        %1399 = vmatprep.mubr.f32.mxu0 0.0
        %1400 = vmatmul.mubr.f32.gmra.mxu0 %v1192
        %v1401 = vpop.f32.mrf.mxu0
        %v1402 = vadd.f32 %v1223, %v1401
        %v1403 = vpop.f32.mrf.mxu0
        %1404 = vmatprep.mubr.f32.mxu0 0.0
        %1405 = vmatmul.mubr.f32.gmra.mxu0 %v1193
        %v1406 = vpop.f32.mrf.mxu0
        %v1407 = vadd.f32 %v1223, %v1406
        %v1408 = vpop.f32.mrf.mxu0
        %1409 = vmatprep.mubr.f32.mxu0 0.0
        %1410 = vmatmul.mubr.f32.gmra.mxu0 %v1194
        %v1411 = vpop.f32.mrf.mxu0
        %v1412 = vadd.f32 %v1223, %v1411
        %v1413 = vpop.f32.mrf.mxu0
        %1414 = vmatprep.mubr.f32.mxu0 0.0
        %1415 = vmatmul.mubr.f32.gmra.mxu0 %v1195
        %v1416 = vpop.f32.mrf.mxu0
        %v1417 = vadd.f32 %v1223, %v1416
        %v1418 = vpop.f32.mrf.mxu0
        %1419 = vmatprep.mubr.f32.mxu0 0.0
        %1420 = vmatmul.mubr.f32.gmra.mxu0 %v1196
        %v1421 = vpop.f32.mrf.mxu0
        %v1422 = vadd.f32 %v1223, %v1421
        %v1423 = vpop.f32.mrf.mxu0
        %1424 = vmatprep.mubr.f32.mxu0 0.0
        %1425 = vmatmul.mubr.f32.gmra.mxu0 %v1197
        %v1426 = vpop.f32.mrf.mxu0
        %v1427 = vadd.f32 %v1223, %v1426
        %v1428 = vpop.f32.mrf.mxu0
        %1429 = vmatprep.mubr.f32.mxu0 0.0
        %1430 = vmatmul.mubr.f32.gmra.mxu0 %v1198
        %v1431 = vpop.f32.mrf.mxu0
        %v1432 = vadd.f32 %v1223, %v1431
        %v1433 = vpop.f32.mrf.mxu0
        %1434 = vmatprep.mubr.f32.mxu0 0.0
        %1435 = vmatmul.mubr.f32.gmra.mxu0 %v1199
        %v1436 = vpop.f32.mrf.mxu0
        %v1437 = vadd.f32 %v1223, %v1436
        %v1438 = vpop.f32.mrf.mxu0
        %1439 = vmatprep.mubr.f32.mxu0 0.0
        %1440 = vmatmul.mubr.f32.gmra.mxu0 %v1200
        %v1441 = vpop.f32.mrf.mxu0
        %v1442 = vadd.f32 %v1223, %v1441
        %v1443 = vpop.f32.mrf.mxu0
        %1444 = vmatprep.mubr.f32.mxu0 0.0
        %1445 = vmatmul.mubr.f32.gmra.mxu0 %v1201
        %v1446 = vpop.f32.mrf.mxu0
        %v1447 = vadd.f32 %v1223, %v1446
        %v1448 = vpop.f32.mrf.mxu0
        %1449 = vdwg.mxu0
        %1450 = vst [vmem:[%s241] sm:$0xff] %v1292
        %1451 = vst [vmem:[%s241 + $0x8] sm:$0xff] %v1297
        %1452 = vst [vmem:[%s241 + $0x10] sm:$0xff] %v1302
        %1453 = vst [vmem:[%s241 + $0x18] sm:$0xff] %v1307
        %1454 = vst [vmem:[%s241 + $0x20] sm:$0xff] %v1312
        %1455 = vst [vmem:[%s241 + $0x28] sm:$0xff] %v1317
        %1456 = vst [vmem:[%s241 + $0x30] sm:$0xff] %v1322
        %1457 = vst [vmem:[%s241 + $0x38] sm:$0xff] %v1327
        %1458 = vst [vmem:[%s241 + $0x40] sm:$0xff] %v1332
        %1459 = vst [vmem:[%s241 + $0x48] sm:$0xff] %v1337
        %1460 = vst [vmem:[%s241 + $0x50] sm:$0xff] %v1342
        %1461 = vst [vmem:[%s241 + $0x58] sm:$0xff] %v1347
        %1462 = vst [vmem:[%s241 + $0x60] sm:$0xff] %v1352
        %1463 = vst [vmem:[%s241 + $0x68] sm:$0xff] %v1357
        %1464 = vst [vmem:[%s241 + $0x70] sm:$0xff] %v1362
        %1465 = vst [vmem:[%s241 + $0x78] sm:$0xff] %v1367
        %1466 = vst [vmem:[%s241 + $0x80] sm:$0xff] %v1372
        %1467 = vst [vmem:[%s241 + $0x88] sm:$0xff] %v1377
        %1468 = vst [vmem:[%s241 + $0x90] sm:$0xff] %v1382
        %1469 = vst [vmem:[%s241 + $0x98] sm:$0xff] %v1387
        %1470 = vst [vmem:[%s241 + $0xa0] sm:$0xff] %v1392
        %1471 = vst [vmem:[%s241 + $0xa8] sm:$0xff] %v1397
        %1472 = vst [vmem:[%s241 + $0xb0] sm:$0xff] %v1402
        %1473 = vst [vmem:[%s241 + $0xb8] sm:$0xff] %v1407
        %1474 = vst [vmem:[%s241 + $0xc0] sm:$0xff] %v1412
        %1475 = vst [vmem:[%s241 + $0xc8] sm:$0xff] %v1417
        %1476 = vst [vmem:[%s241 + $0xd0] sm:$0xff] %v1422
        %1477 = vst [vmem:[%s241 + $0xd8] sm:$0xff] %v1427
        %1478 = vst [vmem:[%s241 + $0xe0] sm:$0xff] %v1432
        %1479 = vst [vmem:[%s241 + $0xe8] sm:$0xff] %v1437
        %1480 = vst [vmem:[%s241 + $0xf0] sm:$0xff] %v1442
        %1481 = vst [vmem:[%s241 + $0xf8] sm:$0xff] %v1447
        %s1482 = sand.u32 %s153, 1
        %s1483 = scalar_lea.sflag [#allocation3], %s1482
        %s1484 = sand.u32 %s153, 1
        %s1485 = smul.addr %s1484, 256
        %s1486 = scalar_lea.vmem [#allocation2], %s1485
        // Predicated region
        $region41: #{tpu_custom_call.1} parent=39 // pred_check
          %p1487 = pneg %p163
        $region42: #{tpu_custom_call.1} parent=39 // pred_check_branch
          %1489 = sbr.rel (%p1487) target = $region44
        $region43: #{tpu_custom_call.1} parent=39 // pred_region
          %s1490 = smul.u32 16, %s24
          %s1492 = ssub.s32 4096, 4096
          %1493 = vsyncadd %s1483, %s1492
          %s1494 = smul.addr %s1490, 2
          %s1495 = smul.addr %s23, 32
          %s1496 = sadd.s32 %s1494, %s1495
          %s1497 = smul.addr %s1496, 128
          %s1498 = scalar_lea.hbm %s5, %s1497
          %s1499 = sshll.u32 %s1486, 4
          %s1500 = int_to_ptr.vmem [resolvable:$true] %s1499
          %1505 = dma.vmem_to_hbm [thread:$0]  %s1500, 4096, %s1498, %s1483, 128, 128, 8
        $region44: #{tpu_custom_call.1} parent=39 // pred_fallthru
          _
      $region40: #{tpu_custom_call.1} parent=5 // pred_fallthru
        _
      %p1506 = scmp.le.s32.totalorder 2, %s14
      // Predicated region
      $region45: #{tpu_custom_call.1} parent=5 // pred_check
        %p1507 = pneg %p1506
      $region46: #{tpu_custom_call.1} parent=5 // pred_check_branch
        %1509 = sbr.rel (%p1507) target = $region48
      $region47: #{tpu_custom_call.1} parent=5 // pred_region
        %s1510 = ssub.s32 %s14, 2
        // Predicated region
        $region49: #{tpu_custom_call.1} parent=47 // pred_check
          %p1511 = pneg %p169
        $region50: #{tpu_custom_call.1} parent=47 // pred_check_branch
          %1513 = sbr.rel (%p1511) target = $region52
        $region51: #{tpu_custom_call.1} parent=47 // pred_region
          %s1514 = sand.u32 %s154, 1
          %s1515 = scalar_lea.sflag [#allocation3], %s1514
          %s1516 = sand.u32 %s154, 1
          %s1517 = smul.addr %s1516, 256
          %s1518 = scalar_lea.vmem [#allocation2], %s1517
          %1519 = dma.done %s1515, 4096
        $region52: #{tpu_custom_call.1} parent=47 // pred_fallthru
          _
      $region48: #{tpu_custom_call.1} parent=5 // pred_fallthru
        _
    $region6: #{tpu_custom_call.1} parent=1 // loop_footer
      %s18 = sadd.s32 1, %s14
    $region7: #{tpu_custom_call.1} parent=1 // loop_footer_branch
      %13 = sbr.rel target = $region3
    $region8: #{tpu_custom_call.1} parent=1 // loop_exit
      _
    %1520 = vsyncpa [#allocation3], 1
    %s1521 = scalar_lea.sflag [#allocation3], 1
    %1522 = vsyncpa %s1521, 1

</llo_original>
